<compile_context>
chip_gen: v5e
topology: v5e:2x2
jax: 0.10.0
libtpu: 0.0.40
codegen_flags: <defaults>
</compile_context>

<pallas_src>
import functools

import jax
import jax.numpy as jnp
from jax import lax
from jax.experimental import pallas as pl
from jax.experimental.pallas import tpu as pltpu

EPS = 1e-8

try:
    _SMEM = pltpu.MemorySpace.SMEM
except AttributeError:          # older spelling
    _SMEM = pltpu.SMEM


def _round_up(n, m):
    return ((n + m - 1) // m) * m


def _vmem_capacity_bytes():
    try:
        cap = getattr(pltpu.get_tpu_info(), "vmem_capacity_bytes", None)
        if cap:
            return int(cap)
    except Exception:
        pass
    return 64 << 20                       # conservative: assume v7x-sized VMEM


def _mosaic_params(dims, est_bytes, budget):
    # Always set a clamped scoped-VMEM limit (v5e's default is only 16 MiB);
    # never ask for more than ~85% of this generation's physical VMEM.
    limit = int(min(max(2 * est_bytes + (8 << 20), 32 << 20), budget))
    return pltpu.CompilerParams(dimension_semantics=dims,
                                vmem_limit_bytes=limit)


def _prelu(x, a):
    return jnp.where(x >= 0, x, a * x)


def _masked_group_norm(x, gamma, beta, mask, n_valid, zero_invalid):
    # nn.GroupNorm(1, C): stats over all (C, T_valid) elements of one item.
    # One-pass E[x^2]-E[x]^2 in f32 (slightly less robust than two-pass for
    # large means; covered by test tolerances).  gamma/beta folded into a
    # single multiply-add.
    xm = jnp.where(mask, x, 0.0)
    inv_n = 1.0 / float(n_valid)
    m = jnp.sum(xm) * inv_n
    ex2 = jnp.sum(xm * xm) * inv_n
    var = jnp.maximum(ex2 - m * m, 0.0)
    inv = lax.rsqrt(var + EPS)            # EUP, not a VALU divide
    scale = gamma * inv                   # (H, 1)
    shift = beta - m * scale              # (H, 1)
    y = xm * scale + shift
    if zero_invalid:
        y = jnp.where(mask, y, 0.0)       # padded lanes -> exact zeros
    return y


# ---------------------------------------------------------------------------
# Fused whole-T path (one grid step per batch item).
# ---------------------------------------------------------------------------
def _fused_kernel(kernel_size, dilation, padding, t_in, t_out, c_in,
                  x_ref, a1_ref, a2_ref,
                  w1_ref, b1_ref, g1_ref, be1_ref,
                  wd_ref, bd_ref, g2_ref, be2_ref,
                  wrs_ref, br_ref, bs_ref,
                  res_ref, skip_ref):
    x = x_ref[0]                                              # (C_in, Lp) bf16
    lp = x.shape[1]
    lane = lax.broadcasted_iota(jnp.int32, (1, lp), 1)
    valid_in = lane < t_in
    valid_out = lane < t_out

    # ---- 1x1 conv (bf16 MXU, f32 acc) + PReLU + GroupNorm(1) ----
    h = jnp.dot(w1_ref[...], x, preferred_element_type=jnp.float32) + b1_ref[...]
    h = _prelu(h, a1_ref[0])
    # zero_invalid=True: padded lanes are exactly zero afterwards, so the tap
    # loop below needs no per-tap source mask (zero-padding semantics).
    h = _masked_group_norm(h, g1_ref[...], be1_ref[...], valid_in,
                           h.shape[0] * t_in, zero_invalid=True)

    # ---- depthwise dilated conv: XLU lane rolls, mask-free taps ----
    acc = None
    for k in range(kernel_size):                              # unrolled taps
        s = k * dilation - padding                            # static shift
        tap = h if s == 0 else pltpu.roll(h, shift=(-s) % lp, axis=1)
        # Edge masks only when the circular roll would wrap real data into
        # lanes that survive the crop.
        if s < 0 and (-s) > lp - t_in:
            tap = jnp.where(lane >= (-s), tap, 0.0)
        elif s > 0 and s > lp - t_out:
            tap = jnp.where(lane < lp - s, tap, 0.0)
        tap = wd_ref[k] * tap                                 # (H,1) contiguous
        acc = tap if acc is None else acc + tap
    y = acc + bd_ref[...]

    # ---- PReLU + GroupNorm(1) ----
    y = _prelu(y, a2_ref[0])
    y = _masked_group_norm(y, g2_ref[...], be2_ref[...], valid_out,
                           y.shape[0] * t_out, zero_invalid=False)

    # ---- fused residual + skip 1x1 conv: one MXU matmul ----
    z = jnp.dot(wrs_ref[...], y.astype(jnp.bfloat16),
                preferred_element_type=jnp.float32)           # (2*C, Lp)
    res_ref[0] = z[:c_in] + br_ref[...]
    skip_ref[0] = z[c_in:] + bs_ref[...]


def _depth_conv1d_fused(x, params, *, kernel_size, dilation, padding,
                        t_out, crop, budget, est):
    B, C_in, T = x.shape
    H = params["w1"].shape[0]
    Lp = max(_round_up(max(T, t_out), 128), 128)

    xp = x if Lp == T else jnp.pad(x, ((0, 0), (0, 0), (0, Lp - T)))
    xp = xp.astype(jnp.bfloat16)                              # bf16 input DMA

    w1 = params["w1"].astype(jnp.bfloat16)
    wrs = jnp.concatenate([params["wr"], params["ws"]], 0).astype(jnp.bfloat16)
    wd = jnp.transpose(params["wd"])[:, :, None]              # (K, H, 1)
    a1 = params["a1"].reshape((1,))
    a2 = params["a2"].reshape((1,))

    args = (xp, a1, a2,
            w1, params["b1"], params["g1"], params["be1"],
            wd, params["bd"], params["g2"], params["be2"],
            wrs, params["br"], params["bs"])

    def full_spec(a):
        nd = a.ndim
        return pl.BlockSpec(a.shape, lambda b, _nd=nd: (0,) * _nd)

    in_specs = [pl.BlockSpec((1, C_in, Lp), lambda b: (b, 0, 0)),
                pl.BlockSpec(memory_space=_SMEM),
                pl.BlockSpec(memory_space=_SMEM)]
    in_specs += [full_spec(a) for a in args[3:]]
    out_specs = [pl.BlockSpec((1, C_in, Lp), lambda b: (b, 0, 0)),
                 pl.BlockSpec((1, C_in, Lp), lambda b: (b, 0, 0))]
    out_shape = (jax.ShapeDtypeStruct((B, C_in, Lp), jnp.float32),
                 jax.ShapeDtypeStruct((B, C_in, Lp), jnp.float32))

    kernel = functools.partial(_fused_kernel, kernel_size, dilation, padding,
                               T, t_out, C_in)
    res, skip = pl.pallas_call(
        kernel, grid=(B,),
        in_specs=in_specs, out_specs=out_specs, out_shape=out_shape,
        compiler_params=_mosaic_params(("parallel",), est, budget),
    )(*args)

    if crop and t_out != Lp:
        res, skip = res[:, :, :t_out], skip[:, :, :t_out]
    return res, skip


# ---------------------------------------------------------------------------
# Time-tiled path (grid=(B, T_tiles), halo + two-pass GroupNorm).
# ---------------------------------------------------------------------------
def _pass1_kernel(t_in, x_ref, a1_ref, w1_ref, b1_ref, h_ref, stats_ref):
    t = pl.program_id(1)

    @pl.when(t == 0)
    def _():
        stats_ref[...] = jnp.zeros_like(stats_ref)

    h = jnp.dot(w1_ref[...], x_ref[0],
                preferred_element_type=jnp.float32) + b1_ref[...]
    h = _prelu(h, a1_ref[0])
    h_ref[0] = h

    tt = h.shape[1]
    lane = lax.broadcasted_iota(jnp.int32, (1, tt), 1)
    hm = jnp.where((t * tt + lane) < t_in, h, 0.0)
    s1 = jnp.sum(hm)
    s2 = jnp.sum(hm * hm)
    stats_ref[0] += jnp.concatenate(
        [jnp.full((1, 128), s1, jnp.float32),
         jnp.full((1, 128), s2, jnp.float32)], axis=0)


def _pass2_kernel(kernel_size, dilation, padding, t_in, t_out,
                  hp_ref, hc_ref, hn_ref, scale_ref, shift_ref,
                  wd_ref, bd_ref, a2_ref, y_ref, stats_ref):
    t = pl.program_id(1)

    @pl.when(t == 0)
    def _():
        stats_ref[...] = jnp.zeros_like(stats_ref)

    tt = hc_ref.shape[2]
    # [prev | cur | next] halo window; normalize (GroupNorm1 scale/shift),
    # then zero everything whose global input index is outside [0, t_in):
    # this also implements the conv's zero padding, so the taps are mask-free.
    win = jnp.concatenate([hp_ref[0], hc_ref[0], hn_ref[0]], axis=1)  # (H,3Tt)
    win = win * scale_ref[0] + shift_ref[0]
    j = lax.broadcasted_iota(jnp.int32, (1, 3 * tt), 1)
    g = (t - 1) * tt + j
    win = jnp.where(jnp.logical_and(g >= 0, g < t_in), win, 0.0)

    acc = None
    for k in range(kernel_size):
        s = k * dilation - padding
        rolled = win if s == 0 else pltpu.roll(win, shift=(-s) % (3 * tt), axis=1)
        tap = wd_ref[k] * rolled[:, tt:2 * tt]                # lane-aligned slice
        acc = tap if acc is None else acc + tap
    y = _prelu(acc + bd_ref[...], a2_ref[0])
    y_ref[0] = y

    lane = lax.broadcasted_iota(jnp.int32, (1, tt), 1)
    ym = jnp.where((t * tt + lane) < t_out, y, 0.0)
    s1 = jnp.sum(ym)
    s2 = jnp.sum(ym * ym)
    stats_ref[0] += jnp.concatenate(
        [jnp.full((1, 128), s1, jnp.float32),
         jnp.full((1, 128), s2, jnp.float32)], axis=0)


def _pass3_kernel(c_in, y_ref, scale_ref, shift_ref, wrs_ref, br_ref, bs_ref,
                  res_ref, skip_ref):
    y = y_ref[0] * scale_ref[0] + shift_ref[0]
    z = jnp.dot(wrs_ref[...], y.astype(jnp.bfloat16),
                preferred_element_type=jnp.float32)
    res_ref[0] = z[:c_in] + br_ref[...]
    skip_ref[0] = z[c_in:] + bs_ref[...]


def _affine_from_stats(stats, gamma, beta, n_valid):
    s = stats[:, 0, 0]
    s2 = stats[:, 1, 0]
    inv_n = 1.0 / float(n_valid)
    m = s * inv_n
    var = jnp.maximum(s2 * inv_n - m * m, 0.0)
    inv = lax.rsqrt(var + EPS)
    scale = gamma[None, :, :] * inv[:, None, None]            # (B, H, 1)
    shift = beta[None, :, :] - m[:, None, None] * scale
    return scale, shift


def _depth_conv1d_tiled(x, params, *, kernel_size, dilation, padding,
                        t_out, time_tile, crop, budget):
    B, C_in, T = x.shape
    H = params["w1"].shape[0]
    halo = max(padding, dilation * (kernel_size - 1) - padding, 1)
    Tt = 512 if time_tile is None else int(time_tile)
    Tt = _round_up(max(Tt, halo, 128), 128)
    Lp = _round_up(max(T, t_out), Tt)
    nT = Lp // Tt

    xp = x if Lp == T else jnp.pad(x, ((0, 0), (0, 0), (0, Lp - T)))
    xp = xp.astype(jnp.bfloat16)

    w1 = params["w1"].astype(jnp.bfloat16)
    wrs = jnp.concatenate([params["wr"], params["ws"]], 0).astype(jnp.bfloat16)
    wd = jnp.transpose(params["wd"])[:, :, None]              # (K, H, 1)
    a1 = params["a1"].reshape((1,))
    a2 = params["a2"].reshape((1,))

    def full_spec2(a):
        nd = a.ndim
        return pl.BlockSpec(a.shape, lambda b, t, _nd=nd: (0,) * _nd)

    smem_spec = pl.BlockSpec(memory_space=_SMEM)
    stats_spec = pl.BlockSpec((1, 2, 128), lambda b, t: (b, 0, 0))
    stats_shape = jax.ShapeDtypeStruct((B, 2, 128), jnp.float32)

    # ---- pass 1: 1x1 conv + PReLU, accumulate per-item sum / sumsq ----
    est1 = (2 * C_in * Tt * 2 + 2 * 2 * H * Tt * 4 + 3 * H * Tt * 4)
    h_pre, stats1 = pl.pallas_call(
        functools.partial(_pass1_kernel, T),
        grid=(B, nT),
        in_specs=[pl.BlockSpec((1, C_in, Tt), lambda b, t: (b, 0, t)),
                  smem_spec, full_spec2(w1), full_spec2(params["b1"])],
        out_specs=[pl.BlockSpec((1, H, Tt), lambda b, t: (b, 0, t)),
                   stats_spec],
        out_shape=(jax.ShapeDtypeStruct((B, H, Lp), jnp.float32), stats_shape),
        compiler_params=_mosaic_params(("parallel", "arbitrary"), est1, budget),
    )(xp, a1, w1, params["b1"])

    scale1, shift1 = _affine_from_stats(stats1, params["g1"], params["be1"], H * T)

    # ---- pass 2: depthwise dilated conv with halo tiles + PReLU + stats ----
    est2 = (3 * 2 * H * Tt * 4 + 2 * 2 * H * Tt * 4 + 5 * 3 * H * Tt * 4)
    y_pre, stats2 = pl.pallas_call(
        functools.partial(_pass2_kernel, kernel_size, dilation, padding, T, t_out),
        grid=(B, nT),
        in_specs=[pl.BlockSpec((1, H, Tt), lambda b, t: (b, 0, jnp.maximum(t - 1, 0))),
                  pl.BlockSpec((1, H, Tt), lambda b, t: (b, 0, t)),
                  pl.BlockSpec((1, H, Tt), lambda b, t: (b, 0, jnp.minimum(t + 1, nT - 1))),
                  pl.BlockSpec((1, H, 1), lambda b, t: (b, 0, 0)),
                  pl.BlockSpec((1, H, 1), lambda b, t: (b, 0, 0)),
                  full_spec2(wd), full_spec2(params["bd"]), smem_spec],
        out_specs=[pl.BlockSpec((1, H, Tt), lambda b, t: (b, 0, t)),
                   stats_spec],
        out_shape=(jax.ShapeDtypeStruct((B, H, Lp), jnp.float32), stats_shape),
        compiler_params=_mosaic_params(("parallel", "arbitrary"), est2, budget),
    )(h_pre, h_pre, h_pre, scale1, shift1, wd, params["bd"], a2)

    scale2, shift2 = _affine_from_stats(stats2, params["g2"], params["be2"], H * t_out)

    # ---- pass 3: GroupNorm2 apply + fused residual/skip 1x1 conv ----
    est3 = (2 * H * Tt * 4 + 2 * 2 * 2 * C_in * Tt * 4 + 3 * H * Tt * 4)
    res, skip = pl.pallas_call(
        functools.partial(_pass3_kernel, C_in),
        grid=(B, nT),
        in_specs=[pl.BlockSpec((1, H, Tt), lambda b, t: (b, 0, t)),
                  pl.BlockSpec((1, H, 1), lambda b, t: (b, 0, 0)),
                  pl.BlockSpec((1, H, 1), lambda b, t: (b, 0, 0)),
                  full_spec2(wrs), full_spec2(params["br"]), full_spec2(params["bs"])],
        out_specs=[pl.BlockSpec((1, C_in, Tt), lambda b, t: (b, 0, t)),
                   pl.BlockSpec((1, C_in, Tt), lambda b, t: (b, 0, t))],
        out_shape=(jax.ShapeDtypeStruct((B, C_in, Lp), jnp.float32),
                   jax.ShapeDtypeStruct((B, C_in, Lp), jnp.float32)),
        compiler_params=_mosaic_params(("parallel", "parallel"), est3, budget),
    )(y_pre, scale2, shift2, wrs, params["br"], params["bs"])

    if crop and t_out != Lp:
        res, skip = res[:, :, :t_out], skip[:, :, :t_out]
    return res, skip


# ---------------------------------------------------------------------------
# Dispatcher.
# ---------------------------------------------------------------------------
def depth_conv1d(x, params, *, kernel_size, dilation, padding,
                 force_tiled=False, time_tile=None, crop=True):
    B, C_in, T = x.shape
    H = params["w1"].shape[0]
    t_out = T + 2 * padding - dilation * (kernel_size - 1)
    assert t_out >= 1

    budget = int(0.85 * _vmem_capacity_bytes())
    Lp = max(_round_up(max(T, t_out), 128), 128)
    est_fused = (5 * H * Lp * 4                 # live (H, Lp) f32 temporaries
                 + 2 * C_in * Lp * 2 * 2        # bf16 x block, double-buffered
                 + 2 * 2 * C_in * Lp * 4 * 2    # res+skip blocks, double-buffered
                 + 2 * C_in * Lp * 4)           # fused matmul result

    if force_tiled or est_fused + (8 << 20) > budget:
        return _depth_conv1d_tiled(x, params, kernel_size=kernel_size,
                                   dilation=dilation, padding=padding,
                                   t_out=t_out, time_tile=time_tile,
                                   crop=crop, budget=budget)
    return _depth_conv1d_fused(x, params, kernel_size=kernel_size,
                               dilation=dilation, padding=padding,
                               t_out=t_out, crop=crop, budget=budget,
                               est=est_fused)


# ---------------------------------------------------------------------------
# Pure-JAX reference (faithful port of DepthConv1d.forward, causal=False).
# ---------------------------------------------------------------------------
def reference(x, p, *, kernel_size, dilation, padding, bf16_matmul=False):
    def cast(a):
        return a.astype(jnp.bfloat16) if bf16_matmul else a

    prec = lax.Precision.DEFAULT if bf16_matmul else lax.Precision.HIGHEST

    def prelu(v, a):
        return jnp.where(v >= 0, v, a * v)

    def gln(v, g, b):
        m = jnp.mean(v, axis=(1, 2), keepdims=True)
        var = jnp.mean((v - m) ** 2, axis=(1, 2), keepdims=True)
        return (v - m) / jnp.sqrt(var + EPS) * g[None] + b[None]

    h = jnp.einsum("hc,bct->bht", cast(p["w1"]), cast(x), precision=prec,
                   preferred_element_type=jnp.float32) + p["b1"][None]
    h = prelu(h, p["a1"][0, 0])
    h = gln(h, p["g1"], p["be1"])

    wd = p["wd"][:, None, :]                                   # (H, 1, K)
    y = lax.conv_general_dilated(
        h, wd, window_strides=(1,), padding=[(padding, padding)],
        rhs_dilation=(dilation,), dimension_numbers=("NCH", "OIH", "NCH"),
        feature_group_count=h.shape[1], precision=lax.Precision.HIGHEST)
    y = y + p["bd"][None]
    y = prelu(y, p["a2"][0, 0])
    y = gln(y, p["g2"], p["be2"])

    res = jnp.einsum("ch,bht->bct", cast(p["wr"]), cast(y), precision=prec,
                     preferred_element_type=jnp.float32) + p["br"][None]
    skip = jnp.einsum("ch,bht->bct", cast(p["ws"]), cast(y), precision=prec,
                      preferred_element_type=jnp.float32) + p["bs"][None]
    return res, skip


if __name__ == "__main__":
    f32 = jnp.float32
    B, C_IN, H, KERNEL = 2, 4, 32, 3

    key = jax.random.PRNGKey(0)
    ks = jax.random.split(key, 16)
    params = {
        "w1":  0.3 * jax.random.normal(ks[0], (H, C_IN), f32),
        "b1":  0.1 * jax.random.normal(ks[1], (H, 1), f32),
        "a1":  jnp.full((1, 1), 0.25, f32),                  # PReLU default init
        "g1":  1.0 + 0.1 * jax.random.normal(ks[2], (H, 1), f32),
        "be1": 0.1 * jax.random.normal(ks[3], (H, 1), f32),
        "wd":  0.3 * jax.random.normal(ks[4], (H, KERNEL), f32),
        "bd":  0.1 * jax.random.normal(ks[5], (H, 1), f32),
        "a2":  jnp.full((1, 1), 0.25, f32),
        "g2":  1.0 + 0.1 * jax.random.normal(ks[6], (H, 1), f32),
        "be2": 0.1 * jax.random.normal(ks[7], (H, 1), f32),
        "wr":  0.3 * jax.random.normal(ks[8], (C_IN, H), f32),
        "br":  0.1 * jax.random.normal(ks[9], (C_IN, 1), f32),
        "ws":  0.3 * jax.random.normal(ks[10], (C_IN, H), f32),
        "bs":  0.1 * jax.random.normal(ks[11], (C_IN, 1), f32),
    }

    def check(res, skip, x, dil, pad):
        res_bf, skip_bf = reference(x, params, kernel_size=KERNEL,
                                    dilation=dil, padding=pad, bf16_matmul=True)
        assert jnp.allclose(res, res_bf, atol=5e-3, rtol=5e-3), "residual mismatch (bf16 ref)"
        assert jnp.allclose(skip, skip_bf, atol=5e-3, rtol=5e-3), "skip mismatch (bf16 ref)"
        res_f, skip_f = reference(x, params, kernel_size=KERNEL,
                                  dilation=dil, padding=pad, bf16_matmul=False)
        assert jnp.allclose(res, res_f, atol=5e-2, rtol=5e-2), "residual mismatch (f32 ref)"
        assert jnp.allclose(skip, skip_f, atol=5e-2, rtol=5e-2), "skip mismatch (f32 ref)"

    # --- test 1: fused whole-T path (small T) ---
    T1, DIL1 = 16, 2
    PAD1 = DIL1 * (KERNEL - 1) // 2
    x1 = jax.random.normal(ks[12], (B, C_IN, T1), f32)
    res1, skip1 = depth_conv1d(x1, params, kernel_size=KERNEL,
                               dilation=DIL1, padding=PAD1)
    jax.block_until_ready((res1, skip1))
    check(res1, skip1, x1, DIL1, PAD1)

    # --- test 2: time-tiled path (grid=(B, T_tiles), halo + two-pass GN) ---
    T2, DIL2 = 300, 8
    PAD2 = DIL2 * (KERNEL - 1) // 2
    x2 = jax.random.normal(ks[13], (B, C_IN, T2), f32)
    res2, skip2 = depth_conv1d(x2, params, kernel_size=KERNEL,
                               dilation=DIL2, padding=PAD2,
                               force_tiled=True, time_tile=128)
    jax.block_until_ready((res2, skip2))
    check(res2, skip2, x2, DIL2, PAD2)

    print("KERNEL_OK")
</pallas_src>

<mosaic_0001>
module attributes {stable_mosaic.version = 11 : i64} {
  func.func @_fused_kernel(%arg0: i32, %arg1: memref<1x4x128xbf16, #tpu.memory_space<vmem>>, %arg2: memref<1xf32, #tpu.memory_space<smem>>, %arg3: memref<1xf32, #tpu.memory_space<smem>>, %arg4: memref<32x4xbf16, #tpu.memory_space<vmem>>, %arg5: memref<32x1xf32, #tpu.memory_space<vmem>>, %arg6: memref<32x1xf32, #tpu.memory_space<vmem>>, %arg7: memref<32x1xf32, #tpu.memory_space<vmem>>, %arg8: memref<3x32x1xf32, #tpu.memory_space<vmem>>, %arg9: memref<32x1xf32, #tpu.memory_space<vmem>>, %arg10: memref<32x1xf32, #tpu.memory_space<vmem>>, %arg11: memref<32x1xf32, #tpu.memory_space<vmem>>, %arg12: memref<8x32xbf16, #tpu.memory_space<vmem>>, %arg13: memref<4x1xf32, #tpu.memory_space<vmem>>, %arg14: memref<4x1xf32, #tpu.memory_space<vmem>>, %arg15: memref<1x4x128xf32, #tpu.memory_space<vmem>>, %arg16: memref<1x4x128xf32, #tpu.memory_space<vmem>>) attributes {dimension_semantics = [#tpu.dimension_semantics<parallel>], iteration_bounds = array<i64: 2>, scalar_prefetch = 0 : i64, scratch_operands = 0 : i64, tpu.core_type = #tpu.core_type<tc>, window_params = [{transform_indices = @transform_0, window_bounds = array<i64: 1, 4, 128>}, {transform_indices = @transform_1, window_bounds = array<i64: 1>}, {transform_indices = @transform_2, window_bounds = array<i64: 1>}, {pipeline_mode = #tpu.pipeline_mode<synchronous>, transform_indices = @transform_3, window_bounds = array<i64: 32, 4>}, {pipeline_mode = #tpu.pipeline_mode<synchronous>, transform_indices = @transform_4, window_bounds = array<i64: 32, 1>}, {pipeline_mode = #tpu.pipeline_mode<synchronous>, transform_indices = @transform_5, window_bounds = array<i64: 32, 1>}, {pipeline_mode = #tpu.pipeline_mode<synchronous>, transform_indices = @transform_6, window_bounds = array<i64: 32, 1>}, {pipeline_mode = #tpu.pipeline_mode<synchronous>, transform_indices = @transform_7, window_bounds = array<i64: 3, 32, 1>}, {pipeline_mode = #tpu.pipeline_mode<synchronous>, transform_indices = @transform_8, window_bounds = array<i64: 32, 1>}, {pipeline_mode = #tpu.pipeline_mode<synchronous>, transform_indices = @transform_9, window_bounds = array<i64: 32, 1>}, {pipeline_mode = #tpu.pipeline_mode<synchronous>, transform_indices = @transform_10, window_bounds = array<i64: 32, 1>}, {pipeline_mode = #tpu.pipeline_mode<synchronous>, transform_indices = @transform_11, window_bounds = array<i64: 8, 32>}, {pipeline_mode = #tpu.pipeline_mode<synchronous>, transform_indices = @transform_12, window_bounds = array<i64: 4, 1>}, {pipeline_mode = #tpu.pipeline_mode<synchronous>, transform_indices = @transform_13, window_bounds = array<i64: 4, 1>}, {transform_indices = @transform_14, window_bounds = array<i64: 1, 4, 128>}, {transform_indices = @transform_15, window_bounds = array<i64: 1, 4, 128>}]} {
    %c0 = arith.constant 0 : index
    %c0_0 = arith.constant 0 : index
    %c0_1 = arith.constant 0 : index
    %0 = vector.load %arg1[%c0, %c0_0, %c0_1] : memref<1x4x128xbf16, #tpu.memory_space<vmem>>, vector<1x4x128xbf16>
    %1 = vector.shape_cast %0 : vector<1x4x128xbf16> to vector<4x128xbf16>
    %2 = tpu.iota {dimensions = array<i32: 1>} : vector<1x128xi32>
    %c16_i32 = arith.constant 16 : i32
    %3 = vector.broadcast %c16_i32 : i32 to vector<1x128xi32>
    %4 = arith.cmpi slt, %2, %3 : vector<1x128xi32>
    %c16_i32_2 = arith.constant 16 : i32
    %5 = vector.broadcast %c16_i32_2 : i32 to vector<1x128xi32>
    %6 = arith.cmpi slt, %2, %5 : vector<1x128xi32>
    %c0_3 = arith.constant 0 : index
    %c0_4 = arith.constant 0 : index
    %7 = vector.load %arg4[%c0_3, %c0_4] : memref<32x4xbf16, #tpu.memory_space<vmem>>, vector<32x4xbf16>
    %cst = arith.constant dense<0.000000e+00> : vector<32x128xf32>
    %8 = tpu.matmul %7, %1, %cst {dimension_numbers = #tpu.dot_dimension_numbers<[1], [0], [0], [1], [0, 0, 1, 1], [], []>} : vector<32x4xbf16>, vector<4x128xbf16>, vector<32x128xf32> -> vector<32x128xf32>
    %c0_5 = arith.constant 0 : index
    %c0_6 = arith.constant 0 : index
    %9 = vector.load %arg5[%c0_5, %c0_6] : memref<32x1xf32, #tpu.memory_space<vmem>>, vector<32x1xf32>
    %10 = vector.broadcast %9 : vector<32x1xf32> to vector<32x128xf32>
    %11 = arith.addf %8, %10 : vector<32x128xf32>
    %c0_7 = arith.constant 0 : index
    %12 = memref.load %arg2[%c0_7] : memref<1xf32, #tpu.memory_space<smem>>
    %cst_8 = arith.constant 0.000000e+00 : f32
    %13 = vector.broadcast %cst_8 : f32 to vector<32x128xf32>
    %14 = arith.cmpf oge, %11, %13 : vector<32x128xf32>
    %15 = vector.broadcast %12 : f32 to vector<32x128xf32>
    %16 = arith.mulf %15, %11 : vector<32x128xf32>
    %17 = arith.select %14, %11, %16 : vector<32x128xi1>, vector<32x128xf32>
    %c0_9 = arith.constant 0 : index
    %c0_10 = arith.constant 0 : index
    %18 = vector.load %arg6[%c0_9, %c0_10] : memref<32x1xf32, #tpu.memory_space<vmem>>, vector<32x1xf32>
    %c0_11 = arith.constant 0 : index
    %c0_12 = arith.constant 0 : index
    %19 = vector.load %arg7[%c0_11, %c0_12] : memref<32x1xf32, #tpu.memory_space<vmem>>, vector<32x1xf32>
    %cst_13 = arith.constant 0.000000e+00 : f32
    %20 = vector.shape_cast %4 : vector<1x128xi1> to vector<1x128xi1>
    %21 = vector.broadcast %20 : vector<1x128xi1> to vector<32x128xi1>
    %22 = vector.broadcast %cst_13 : f32 to vector<32x128xf32>
    %23 = arith.select %21, %17, %22 : vector<32x128xi1>, vector<32x128xf32>
    %24 = vector.shape_cast %23 : vector<32x128xf32> to vector<1x32x128xf32>
    %cst_14 = arith.constant dense<0.000000e+00> : vector<1xf32>
    %25 = vector.multi_reduction <add>, %24, %cst_14 [1, 2] : vector<1x32x128xf32> to vector<1xf32>
    %26 = vector.shape_cast %25 : vector<1xf32> to vector<1x1x1xf32>
    %27 = vector.extract %26[0, 0, 0] : f32 from vector<1x1x1xf32>
    %cst_15 = arith.constant 0.001953125 : f32
    %28 = arith.mulf %27, %cst_15 : f32
    %29 = arith.mulf %23, %23 : vector<32x128xf32>
    %30 = vector.shape_cast %29 : vector<32x128xf32> to vector<1x32x128xf32>
    %cst_16 = arith.constant dense<0.000000e+00> : vector<1xf32>
    %31 = vector.multi_reduction <add>, %30, %cst_16 [1, 2] : vector<1x32x128xf32> to vector<1xf32>
    %32 = vector.shape_cast %31 : vector<1xf32> to vector<1x1x1xf32>
    %33 = vector.extract %32[0, 0, 0] : f32 from vector<1x1x1xf32>
    %cst_17 = arith.constant 0.001953125 : f32
    %34 = arith.mulf %33, %cst_17 : f32
    %35 = arith.mulf %28, %28 : f32
    %36 = arith.subf %34, %35 : f32
    %cst_18 = arith.constant 0.000000e+00 : f32
    %37 = arith.maximumf %36, %cst_18 : f32
    %cst_19 = arith.constant 9.99999993E-9 : f32
    %38 = arith.addf %37, %cst_19 : f32
    %39 = math.rsqrt %38 : f32
    %40 = vector.broadcast %39 : f32 to vector<32x1xf32>
    %41 = arith.mulf %18, %40 : vector<32x1xf32>
    %42 = vector.broadcast %28 : f32 to vector<32x1xf32>
    %43 = arith.mulf %42, %41 : vector<32x1xf32>
    %44 = arith.subf %19, %43 : vector<32x1xf32>
    %45 = vector.broadcast %41 : vector<32x1xf32> to vector<32x128xf32>
    %46 = arith.mulf %23, %45 : vector<32x128xf32>
    %47 = vector.broadcast %44 : vector<32x1xf32> to vector<32x128xf32>
    %48 = arith.addf %46, %47 : vector<32x128xf32>
    %cst_20 = arith.constant 0.000000e+00 : f32
    %49 = vector.shape_cast %4 : vector<1x128xi1> to vector<1x128xi1>
    %50 = vector.broadcast %49 : vector<1x128xi1> to vector<32x128xi1>
    %51 = vector.broadcast %cst_20 : f32 to vector<32x128xf32>
    %52 = arith.select %50, %48, %51 : vector<32x128xi1>, vector<32x128xf32>
    %c2_i32 = arith.constant 2 : i32
    %53 = tpu.dynamic_rotate %52 by %c2_i32 dim 1 : vector<32x128xf32>, i32 -> vector<32x128xf32>
    %c0_21 = arith.constant 0 : index
    %c0_22 = arith.constant 0 : index
    %c0_23 = arith.constant 0 : index
    %54 = vector.load %arg8[%c0_21, %c0_22, %c0_23] : memref<3x32x1xf32, #tpu.memory_space<vmem>>, vector<1x32x1xf32>
    %55 = vector.shape_cast %54 : vector<1x32x1xf32> to vector<32x1xf32>
    %56 = vector.broadcast %55 : vector<32x1xf32> to vector<32x128xf32>
    %57 = arith.mulf %56, %53 : vector<32x128xf32>
    %c1 = arith.constant 1 : index
    %c0_24 = arith.constant 0 : index
    %c0_25 = arith.constant 0 : index
    %58 = vector.load %arg8[%c1, %c0_24, %c0_25] : memref<3x32x1xf32, #tpu.memory_space<vmem>>, vector<1x32x1xf32>
    %59 = vector.shape_cast %58 : vector<1x32x1xf32> to vector<32x1xf32>
    %60 = vector.broadcast %59 : vector<32x1xf32> to vector<32x128xf32>
    %61 = arith.mulf %60, %52 : vector<32x128xf32>
    %62 = arith.addf %57, %61 : vector<32x128xf32>
    %c126_i32 = arith.constant 126 : i32
    %63 = tpu.dynamic_rotate %52 by %c126_i32 dim 1 : vector<32x128xf32>, i32 -> vector<32x128xf32>
    %c2 = arith.constant 2 : index
    %c0_26 = arith.constant 0 : index
    %c0_27 = arith.constant 0 : index
    %64 = vector.load %arg8[%c2, %c0_26, %c0_27] : memref<3x32x1xf32, #tpu.memory_space<vmem>>, vector<1x32x1xf32>
    %65 = vector.shape_cast %64 : vector<1x32x1xf32> to vector<32x1xf32>
    %66 = vector.broadcast %65 : vector<32x1xf32> to vector<32x128xf32>
    %67 = arith.mulf %66, %63 : vector<32x128xf32>
    %68 = arith.addf %62, %67 : vector<32x128xf32>
    %c0_28 = arith.constant 0 : index
    %c0_29 = arith.constant 0 : index
    %69 = vector.load %arg9[%c0_28, %c0_29] : memref<32x1xf32, #tpu.memory_space<vmem>>, vector<32x1xf32>
    %70 = vector.broadcast %69 : vector<32x1xf32> to vector<32x128xf32>
    %71 = arith.addf %68, %70 : vector<32x128xf32>
    %c0_30 = arith.constant 0 : index
    %72 = memref.load %arg3[%c0_30] : memref<1xf32, #tpu.memory_space<smem>>
    %cst_31 = arith.constant 0.000000e+00 : f32
    %73 = vector.broadcast %cst_31 : f32 to vector<32x128xf32>
    %74 = arith.cmpf oge, %71, %73 : vector<32x128xf32>
    %75 = vector.broadcast %72 : f32 to vector<32x128xf32>
    %76 = arith.mulf %75, %71 : vector<32x128xf32>
    %77 = arith.select %74, %71, %76 : vector<32x128xi1>, vector<32x128xf32>
    %c0_32 = arith.constant 0 : index
    %c0_33 = arith.constant 0 : index
    %78 = vector.load %arg10[%c0_32, %c0_33] : memref<32x1xf32, #tpu.memory_space<vmem>>, vector<32x1xf32>
    %c0_34 = arith.constant 0 : index
    %c0_35 = arith.constant 0 : index
    %79 = vector.load %arg11[%c0_34, %c0_35] : memref<32x1xf32, #tpu.memory_space<vmem>>, vector<32x1xf32>
    %cst_36 = arith.constant 0.000000e+00 : f32
    %80 = vector.shape_cast %6 : vector<1x128xi1> to vector<1x128xi1>
    %81 = vector.broadcast %80 : vector<1x128xi1> to vector<32x128xi1>
    %82 = vector.broadcast %cst_36 : f32 to vector<32x128xf32>
    %83 = arith.select %81, %77, %82 : vector<32x128xi1>, vector<32x128xf32>
    %84 = vector.shape_cast %83 : vector<32x128xf32> to vector<1x32x128xf32>
    %cst_37 = arith.constant dense<0.000000e+00> : vector<1xf32>
    %85 = vector.multi_reduction <add>, %84, %cst_37 [1, 2] : vector<1x32x128xf32> to vector<1xf32>
    %86 = vector.shape_cast %85 : vector<1xf32> to vector<1x1x1xf32>
    %87 = vector.extract %86[0, 0, 0] : f32 from vector<1x1x1xf32>
    %cst_38 = arith.constant 0.001953125 : f32
    %88 = arith.mulf %87, %cst_38 : f32
    %89 = arith.mulf %83, %83 : vector<32x128xf32>
    %90 = vector.shape_cast %89 : vector<32x128xf32> to vector<1x32x128xf32>
    %cst_39 = arith.constant dense<0.000000e+00> : vector<1xf32>
    %91 = vector.multi_reduction <add>, %90, %cst_39 [1, 2] : vector<1x32x128xf32> to vector<1xf32>
    %92 = vector.shape_cast %91 : vector<1xf32> to vector<1x1x1xf32>
    %93 = vector.extract %92[0, 0, 0] : f32 from vector<1x1x1xf32>
    %cst_40 = arith.constant 0.001953125 : f32
    %94 = arith.mulf %93, %cst_40 : f32
    %95 = arith.mulf %88, %88 : f32
    %96 = arith.subf %94, %95 : f32
    %cst_41 = arith.constant 0.000000e+00 : f32
    %97 = arith.maximumf %96, %cst_41 : f32
    %cst_42 = arith.constant 9.99999993E-9 : f32
    %98 = arith.addf %97, %cst_42 : f32
    %99 = math.rsqrt %98 : f32
    %100 = vector.broadcast %99 : f32 to vector<32x1xf32>
    %101 = arith.mulf %78, %100 : vector<32x1xf32>
    %102 = vector.broadcast %88 : f32 to vector<32x1xf32>
    %103 = arith.mulf %102, %101 : vector<32x1xf32>
    %104 = arith.subf %79, %103 : vector<32x1xf32>
    %105 = vector.broadcast %101 : vector<32x1xf32> to vector<32x128xf32>
    %106 = arith.mulf %83, %105 : vector<32x128xf32>
    %107 = vector.broadcast %104 : vector<32x1xf32> to vector<32x128xf32>
    %108 = arith.addf %106, %107 : vector<32x128xf32>
    %c0_43 = arith.constant 0 : index
    %c0_44 = arith.constant 0 : index
    %109 = vector.load %arg12[%c0_43, %c0_44] : memref<8x32xbf16, #tpu.memory_space<vmem>>, vector<8x32xbf16>
    %110 = arith.truncf %108 : vector<32x128xf32> to vector<32x128xbf16>
    %cst_45 = arith.constant dense<0.000000e+00> : vector<8x128xf32>
    %111 = tpu.matmul %109, %110, %cst_45 {dimension_numbers = #tpu.dot_dimension_numbers<[1], [0], [0], [1], [0, 0, 1, 1], [], []>} : vector<8x32xbf16>, vector<32x128xbf16>, vector<8x128xf32> -> vector<8x128xf32>
    %112 = vector.extract_strided_slice %111 {offsets = [0, 0], sizes = [4, 128], strides = [1, 1]} : vector<8x128xf32> to vector<4x128xf32>
    %c0_46 = arith.constant 0 : index
    %c0_47 = arith.constant 0 : index
    %113 = vector.load %arg13[%c0_46, %c0_47] : memref<4x1xf32, #tpu.memory_space<vmem>>, vector<4x1xf32>
    %114 = vector.broadcast %113 : vector<4x1xf32> to vector<4x128xf32>
    %115 = arith.addf %112, %114 : vector<4x128xf32>
    %c0_48 = arith.constant 0 : index
    %c0_49 = arith.constant 0 : index
    %c0_50 = arith.constant 0 : index
    %116 = vector.load %arg15[%c0_48, %c0_49, %c0_50] : memref<1x4x128xf32, #tpu.memory_space<vmem>>, vector<1x4x128xf32>
    %117 = vector.shape_cast %116 : vector<1x4x128xf32> to vector<4x128xf32>
    %118 = vector.shape_cast %115 : vector<4x128xf32> to vector<1x4x128xf32>
    tpu.vector_store %arg15[%c0_48, %c0_49, %c0_50], %118 {strides = array<i32>} : memref<1x4x128xf32, #tpu.memory_space<vmem>>, vector<1x4x128xf32>,
    %119 = vector.extract_strided_slice %111 {offsets = [4, 0], sizes = [4, 128], strides = [1, 1]} : vector<8x128xf32> to vector<4x128xf32>
    %c0_51 = arith.constant 0 : index
    %c0_52 = arith.constant 0 : index
    %120 = vector.load %arg14[%c0_51, %c0_52] : memref<4x1xf32, #tpu.memory_space<vmem>>, vector<4x1xf32>
    %121 = vector.broadcast %120 : vector<4x1xf32> to vector<4x128xf32>
    %122 = arith.addf %119, %121 : vector<4x128xf32>
    %c0_53 = arith.constant 0 : index
    %c0_54 = arith.constant 0 : index
    %c0_55 = arith.constant 0 : index
    %123 = vector.load %arg16[%c0_53, %c0_54, %c0_55] : memref<1x4x128xf32, #tpu.memory_space<vmem>>, vector<1x4x128xf32>
    %124 = vector.shape_cast %123 : vector<1x4x128xf32> to vector<4x128xf32>
    %125 = vector.shape_cast %122 : vector<4x128xf32> to vector<1x4x128xf32>
    tpu.vector_store %arg16[%c0_53, %c0_54, %c0_55], %125 {strides = array<i32>} : memref<1x4x128xf32, #tpu.memory_space<vmem>>, vector<1x4x128xf32>,
    return
  }
  func.func @transform_0(%arg0: i32) -> (i32, i32, i32) {
    %c0_i32 = arith.constant 0 : i32
    %c0_i32_0 = arith.constant 0 : i32
    %c0_i32_1 = arith.constant 0 : i32
    return %arg0, %c0_i32, %c0_i32_0 : i32, i32, i32
  }
  func.func @transform_1(%arg0: i32) -> i32 {
    %c0_i32 = arith.constant 0 : i32
    %c0_i32_0 = arith.constant 0 : i32
    return %c0_i32 : i32
  }
  func.func @transform_2(%arg0: i32) -> i32 {
    %c0_i32 = arith.constant 0 : i32
    %c0_i32_0 = arith.constant 0 : i32
    return %c0_i32 : i32
  }
  func.func @transform_3(%arg0: i32) -> (i32, i32) {
    %c0_i32 = arith.constant 0 : i32
    %c0_i32_0 = arith.constant 0 : i32
    %c0_i32_1 = arith.constant 0 : i32
    return %c0_i32, %c0_i32_0 : i32, i32
  }
  func.func @transform_4(%arg0: i32) -> (i32, i32) {
    %c0_i32 = arith.constant 0 : i32
    %c0_i32_0 = arith.constant 0 : i32
    %c0_i32_1 = arith.constant 0 : i32
    return %c0_i32, %c0_i32_0 : i32, i32
  }
  func.func @transform_5(%arg0: i32) -> (i32, i32) {
    %c0_i32 = arith.constant 0 : i32
    %c0_i32_0 = arith.constant 0 : i32
    %c0_i32_1 = arith.constant 0 : i32
    return %c0_i32, %c0_i32_0 : i32, i32
  }
  func.func @transform_6(%arg0: i32) -> (i32, i32) {
    %c0_i32 = arith.constant 0 : i32
    %c0_i32_0 = arith.constant 0 : i32
    %c0_i32_1 = arith.constant 0 : i32
    return %c0_i32, %c0_i32_0 : i32, i32
  }
  func.func @transform_7(%arg0: i32) -> (i32, i32, i32) {
    %c0_i32 = arith.constant 0 : i32
    %c0_i32_0 = arith.constant 0 : i32
    %c0_i32_1 = arith.constant 0 : i32
    %c0_i32_2 = arith.constant 0 : i32
    return %c0_i32, %c0_i32_0, %c0_i32_1 : i32, i32, i32
  }
  func.func @transform_8(%arg0: i32) -> (i32, i32) {
    %c0_i32 = arith.constant 0 : i32
    %c0_i32_0 = arith.constant 0 : i32
    %c0_i32_1 = arith.constant 0 : i32
    return %c0_i32, %c0_i32_0 : i32, i32
  }
  func.func @transform_9(%arg0: i32) -> (i32, i32) {
    %c0_i32 = arith.constant 0 : i32
    %c0_i32_0 = arith.constant 0 : i32
    %c0_i32_1 = arith.constant 0 : i32
    return %c0_i32, %c0_i32_0 : i32, i32
  }
  func.func @transform_10(%arg0: i32) -> (i32, i32) {
    %c0_i32 = arith.constant 0 : i32
    %c0_i32_0 = arith.constant 0 : i32
    %c0_i32_1 = arith.constant 0 : i32
    return %c0_i32, %c0_i32_0 : i32, i32
  }
  func.func @transform_11(%arg0: i32) -> (i32, i32) {
    %c0_i32 = arith.constant 0 : i32
    %c0_i32_0 = arith.constant 0 : i32
    %c0_i32_1 = arith.constant 0 : i32
    return %c0_i32, %c0_i32_0 : i32, i32
  }
  func.func @transform_12(%arg0: i32) -> (i32, i32) {
    %c0_i32 = arith.constant 0 : i32
    %c0_i32_0 = arith.constant 0 : i32
    %c0_i32_1 = arith.constant 0 : i32
    return %c0_i32, %c0_i32_0 : i32, i32
  }
  func.func @transform_13(%arg0: i32) -> (i32, i32) {
    %c0_i32 = arith.constant 0 : i32
    %c0_i32_0 = arith.constant 0 : i32
    %c0_i32_1 = arith.constant 0 : i32
    return %c0_i32, %c0_i32_0 : i32, i32
  }
  func.func @transform_14(%arg0: i32) -> (i32, i32, i32) {
    %c0_i32 = arith.constant 0 : i32
    %c0_i32_0 = arith.constant 0 : i32
    %c0_i32_1 = arith.constant 0 : i32
    return %arg0, %c0_i32, %c0_i32_0 : i32, i32, i32
  }
  func.func @transform_15(%arg0: i32) -> (i32, i32, i32) {
    %c0_i32 = arith.constant 0 : i32
    %c0_i32_0 = arith.constant 0 : i32
    %c0_i32_1 = arith.constant 0 : i32
    return %arg0, %c0_i32, %c0_i32_0 : i32, i32, i32
  }
}

</mosaic_0001>

<llo_original>
// kernel: tpu_custom_call.1
$region0: #{tpu_custom_call.1}
  #allocation0 [shape = 'u32[]', space=smem, size = 0x4, offset = 0x4, fixed_abs, tag = 'smem constant byte address 0x4 - core index']
  #allocation1 [shape = 'u32[72,128]{1,0:T(1,128)}', space=vmem, size = 0x9000, scoped, tag = 'internal scratch']
  #allocation2 [shape = 'f32[1]{0:T(128)S(6)}', space=smem, size = 0x200, scoped, tag = 'scoped memory for tpu_custom_call.1']
  #allocation3 [shape = 'f32[1]{0:T(128)S(6)}', space=smem, size = 0x200, scoped, tag = 'scoped memory for tpu_custom_call.1']
  %s0 = inlined_call_operand.vmem [shape: bf16[2,4,128], index: 0, kind: input, shape index: {}]
  %s1 = inlined_call_operand.<no memory space> [shape: f32[1], index: 1, kind: input, shape index: {}]
  %s2 = inlined_call_operand.<no memory space> [shape: f32[1], index: 2, kind: input, shape index: {}]
  %s3 = inlined_call_operand.vmem [shape: bf16[32,4], index: 3, kind: input, shape index: {}]
  %s4 = inlined_call_operand.vmem [shape: f32[32,1], index: 4, kind: input, shape index: {}]
  %s5 = inlined_call_operand.vmem [shape: f32[32,1], index: 5, kind: input, shape index: {}]
  %s6 = inlined_call_operand.vmem [shape: f32[32,1], index: 6, kind: input, shape index: {}]
  %s7 = inlined_call_operand.vmem [shape: f32[3,32,1], index: 7, kind: input, shape index: {}]
  %s8 = inlined_call_operand.vmem [shape: f32[32,1], index: 8, kind: input, shape index: {}]
  %s9 = inlined_call_operand.vmem [shape: f32[32,1], index: 9, kind: input, shape index: {}]
  %s10 = inlined_call_operand.vmem [shape: f32[32,1], index: 10, kind: input, shape index: {}]
  %s11 = inlined_call_operand.vmem [shape: bf16[8,32], index: 11, kind: input, shape index: {}]
  %s12 = inlined_call_operand.vmem [shape: f32[4,1], index: 12, kind: input, shape index: {}]
  %s13 = inlined_call_operand.vmem [shape: f32[4,1], index: 13, kind: input, shape index: {}]
  %s14 = inlined_call_operand.hbm [shape: f32[2,4,128], index: 14, kind: output, shape index: {0}]
  %s15 = inlined_call_operand.hbm [shape: f32[2,4,128], index: 15, kind: output, shape index: {1}]
  %16 = xla_tuple %s14, %s15
  %s17 = sld [smem:[#allocation0]]
  $region97: #{tpu_custom_call.1} parent=0
    _
  %s19 = ssub.s32 1, %s17
  %s20 = scalar_select 0, %s19, %s17
  %21 = sst [smem:[#allocation2]] %s1
  %22 = sst [smem:[#allocation3]] %s2
  $region1: #{tpu_custom_call.1} parent=0
    #allocation4 [shape = 'u8[4096]{0}', space=vmem, size = 0x1000, scoped, tag = 'output window, operand 0']
    #allocation5 [shape = 's32[2]{0}', space=sflag, size = 0x8, scoped, tag = 'scoped memory for tpu_custom_call.1']
    #allocation6 [shape = 'u8[4096]{0}', space=vmem, size = 0x1000, scoped, tag = 'output window, operand 1']
    #allocation7 [shape = 's32[2]{0}', space=sflag, size = 0x8, scoped, tag = 'scoped memory for tpu_custom_call.1']
    %23 = vsyncpa [#allocation5], 0
    %s24 = scalar_lea.sflag [#allocation5], 1
    %25 = vsyncpa %s24, 0
    %26 = vsyncpa [#allocation7], 0
    %s27 = scalar_lea.sflag [#allocation7], 1
    %28 = vsyncpa %s27, 0
    loop: start=0, step=1, limit=4
    $region2: #{tpu_custom_call.1} parent=1 // loop_pre_header
      _
    $region3: #{tpu_custom_call.1} parent=1 // loop_header
      %s30 = sphi 0, %s34
      %p31 = scmp.ge.s32.totalorder %s30, 4
      %s40 = sphi 0, %s42
      %s43 = sphi 0, %s40
      %s44 = sphi 0, %s43
      %s60 = sphi 0, %s44
      %s64 = sphi 0, %s64
      %s66 = sphi 0, %s64
      %s67 = sphi 0, %s66
      %s81 = sphi 0, %s67
      %s85 = sphi 0, %s85
      %s87 = sphi 0, %s85
      %s88 = sphi 0, %s87
      %s102 = sphi 0, %s88
      %s106 = sphi 0, %s106
      %s108 = sphi 0, %s106
      %s109 = sphi 0, %s108
      %s123 = sphi 0, %s109
      %s127 = sphi 0, %s127
      %s129 = sphi 0, %s127
      %s130 = sphi 0, %s129
      %s144 = sphi 0, %s130
      %s148 = sphi 0, %s148
      %s150 = sphi 0, %s148
      %s151 = sphi 0, %s150
      %s165 = sphi 0, %s151
      %s169 = sphi 0, %s169
      %s171 = sphi 0, %s169
      %s172 = sphi 0, %s171
      %s186 = sphi 0, %s172
      %s190 = sphi 0, %s190
      %s192 = sphi 0, %s190
      %s193 = sphi 0, %s192
      %s207 = sphi 0, %s193
      %s211 = sphi 0, %s211
      %s213 = sphi 0, %s211
      %s214 = sphi 0, %s213
      %s228 = sphi 0, %s214
      %s232 = sphi 0, %s232
      %s234 = sphi 0, %s232
      %s235 = sphi 0, %s234
      %s249 = sphi 0, %s235
      %s253 = sphi 0, %s253
      %s255 = sphi 0, %s253
      %s256 = sphi 0, %s255
      %s270 = sphi 0, %s256
      %s274 = sphi 0, %s274
      %s276 = sphi 0, %s274
      %s277 = sphi 0, %s276
      %s291 = sphi 0, %s277
      %s295 = sphi 0, %s295
      %s297 = sphi 0, %s295
      %s298 = sphi 0, %s297
      %s312 = sphi 0, %s298
      %s316 = sphi 0, %s316
      %s318 = sphi 0, %s316
      %s319 = sphi 0, %s318
      %s333 = sphi 0, %s319
      %s339 = sphi 0, %s341
      %s342 = sphi 0, %s339
      %s343 = sphi 0, %s342
      %s359 = sphi 0, %s343
      %s365 = sphi 0, %s367
      %s368 = sphi 0, %s365
      %s369 = sphi 0, %s368
      %s385 = sphi 0, %s369
    $region4: #{tpu_custom_call.1} parent=1 // loop_header_branch
      %33 = sbr.rel (%p31) target = $region8
    $region5: #{tpu_custom_call.1} parent=1 // loop_body
      %s35 = ssub.s32 %s30, 1
      %s36 = ssub.s32 %s30, 2
      %s37 = sadd.s32 %s30, 1
      %s38 = ssub.s32 %s30, %s37
      %p39 = scmp.eq.s32.totalorder %s38, 0
      %s41 = sadd.s32 %s40, 1
      %s42 = scalar_select %p39, %s40, %s41
      %p45 = pneg %p39
      %p46 = scmp.eq.s32.totalorder %s30, 1
      %p47 = por %p45, %p46
      %p48 = scmp.ne.s32.totalorder %s40, %s43
      %p49 = scmp.eq.s32.totalorder %s30, 0
      %p50 = por %p48, %p49
      %p51 = scmp.ne.s32.totalorder %s40, %s43
      %p52 = scmp.eq.s32.totalorder %s35, 1
      %p53 = por %p51, %p52
      %p54 = scmp.ne.s32.totalorder %s43, %s44
      %p55 = scmp.eq.s32.totalorder %s35, 0
      %p56 = por %p54, %p55
      %p57 = scmp.ne.s32.totalorder %s43, %s44
      %p58 = scmp.eq.s32.totalorder %s36, 1
      %p59 = por %p57, %p58
      %p61 = scmp.ne.s32.totalorder %s44, %s60
      %p62 = scmp.eq.s32.totalorder %s36, 0
      %p63 = por %p61, %p62
      %s65 = sadd.s32 %s64, 1
      %p68 = scmp.eq.s32.totalorder %s30, 1
      %p69 = scmp.ne.s32.totalorder %s64, %s66
      %p70 = scmp.eq.s32.totalorder %s30, 0
      %p71 = por %p69, %p70
      %p72 = scmp.ne.s32.totalorder %s64, %s66
      %p73 = scmp.eq.s32.totalorder %s35, 1
      %p74 = por %p72, %p73
      %p75 = scmp.ne.s32.totalorder %s66, %s67
      %p76 = scmp.eq.s32.totalorder %s35, 0
      %p77 = por %p75, %p76
      %p78 = scmp.ne.s32.totalorder %s66, %s67
      %p79 = scmp.eq.s32.totalorder %s36, 1
      %p80 = por %p78, %p79
      %p82 = scmp.ne.s32.totalorder %s67, %s81
      %p83 = scmp.eq.s32.totalorder %s36, 0
      %p84 = por %p82, %p83
      %s86 = sadd.s32 %s85, 1
      %p89 = scmp.eq.s32.totalorder %s30, 1
      %p90 = scmp.ne.s32.totalorder %s85, %s87
      %p91 = scmp.eq.s32.totalorder %s30, 0
      %p92 = por %p90, %p91
      %p93 = scmp.ne.s32.totalorder %s85, %s87
      %p94 = scmp.eq.s32.totalorder %s35, 1
      %p95 = por %p93, %p94
      %p96 = scmp.ne.s32.totalorder %s87, %s88
      %p97 = scmp.eq.s32.totalorder %s35, 0
      %p98 = por %p96, %p97
      %p99 = scmp.ne.s32.totalorder %s87, %s88
      %p100 = scmp.eq.s32.totalorder %s36, 1
      %p101 = por %p99, %p100
      %p103 = scmp.ne.s32.totalorder %s88, %s102
      %p104 = scmp.eq.s32.totalorder %s36, 0
      %p105 = por %p103, %p104
      %s107 = sadd.s32 %s106, 1
      %p110 = scmp.eq.s32.totalorder %s30, 1
      %p111 = scmp.ne.s32.totalorder %s106, %s108
      %p112 = scmp.eq.s32.totalorder %s30, 0
      %p113 = por %p111, %p112
      %p114 = scmp.ne.s32.totalorder %s106, %s108
      %p115 = scmp.eq.s32.totalorder %s35, 1
      %p116 = por %p114, %p115
      %p117 = scmp.ne.s32.totalorder %s108, %s109
      %p118 = scmp.eq.s32.totalorder %s35, 0
      %p119 = por %p117, %p118
      %p120 = scmp.ne.s32.totalorder %s108, %s109
      %p121 = scmp.eq.s32.totalorder %s36, 1
      %p122 = por %p120, %p121
      %p124 = scmp.ne.s32.totalorder %s109, %s123
      %p125 = scmp.eq.s32.totalorder %s36, 0
      %p126 = por %p124, %p125
      %s128 = sadd.s32 %s127, 1
      %p131 = scmp.eq.s32.totalorder %s30, 1
      %p132 = scmp.ne.s32.totalorder %s127, %s129
      %p133 = scmp.eq.s32.totalorder %s30, 0
      %p134 = por %p132, %p133
      %p135 = scmp.ne.s32.totalorder %s127, %s129
      %p136 = scmp.eq.s32.totalorder %s35, 1
      %p137 = por %p135, %p136
      %p138 = scmp.ne.s32.totalorder %s129, %s130
      %p139 = scmp.eq.s32.totalorder %s35, 0
      %p140 = por %p138, %p139
      %p141 = scmp.ne.s32.totalorder %s129, %s130
      %p142 = scmp.eq.s32.totalorder %s36, 1
      %p143 = por %p141, %p142
      %p145 = scmp.ne.s32.totalorder %s130, %s144
      %p146 = scmp.eq.s32.totalorder %s36, 0
      %p147 = por %p145, %p146
      %s149 = sadd.s32 %s148, 1
      %p152 = scmp.eq.s32.totalorder %s30, 1
      %p153 = scmp.ne.s32.totalorder %s148, %s150
      %p154 = scmp.eq.s32.totalorder %s30, 0
      %p155 = por %p153, %p154
      %p156 = scmp.ne.s32.totalorder %s148, %s150
      %p157 = scmp.eq.s32.totalorder %s35, 1
      %p158 = por %p156, %p157
      %p159 = scmp.ne.s32.totalorder %s150, %s151
      %p160 = scmp.eq.s32.totalorder %s35, 0
      %p161 = por %p159, %p160
      %p162 = scmp.ne.s32.totalorder %s150, %s151
      %p163 = scmp.eq.s32.totalorder %s36, 1
      %p164 = por %p162, %p163
      %p166 = scmp.ne.s32.totalorder %s151, %s165
      %p167 = scmp.eq.s32.totalorder %s36, 0
      %p168 = por %p166, %p167
      %s170 = sadd.s32 %s169, 1
      %p173 = scmp.eq.s32.totalorder %s30, 1
      %p174 = scmp.ne.s32.totalorder %s169, %s171
      %p175 = scmp.eq.s32.totalorder %s30, 0
      %p176 = por %p174, %p175
      %p177 = scmp.ne.s32.totalorder %s169, %s171
      %p178 = scmp.eq.s32.totalorder %s35, 1
      %p179 = por %p177, %p178
      %p180 = scmp.ne.s32.totalorder %s171, %s172
      %p181 = scmp.eq.s32.totalorder %s35, 0
      %p182 = por %p180, %p181
      %p183 = scmp.ne.s32.totalorder %s171, %s172
      %p184 = scmp.eq.s32.totalorder %s36, 1
      %p185 = por %p183, %p184
      %p187 = scmp.ne.s32.totalorder %s172, %s186
      %p188 = scmp.eq.s32.totalorder %s36, 0
      %p189 = por %p187, %p188
      %s191 = sadd.s32 %s190, 1
      %p194 = scmp.eq.s32.totalorder %s30, 1
      %p195 = scmp.ne.s32.totalorder %s190, %s192
      %p196 = scmp.eq.s32.totalorder %s30, 0
      %p197 = por %p195, %p196
      %p198 = scmp.ne.s32.totalorder %s190, %s192
      %p199 = scmp.eq.s32.totalorder %s35, 1
      %p200 = por %p198, %p199
      %p201 = scmp.ne.s32.totalorder %s192, %s193
      %p202 = scmp.eq.s32.totalorder %s35, 0
      %p203 = por %p201, %p202
      %p204 = scmp.ne.s32.totalorder %s192, %s193
      %p205 = scmp.eq.s32.totalorder %s36, 1
      %p206 = por %p204, %p205
      %p208 = scmp.ne.s32.totalorder %s193, %s207
      %p209 = scmp.eq.s32.totalorder %s36, 0
      %p210 = por %p208, %p209
      %s212 = sadd.s32 %s211, 1
      %p215 = scmp.eq.s32.totalorder %s30, 1
      %p216 = scmp.ne.s32.totalorder %s211, %s213
      %p217 = scmp.eq.s32.totalorder %s30, 0
      %p218 = por %p216, %p217
      %p219 = scmp.ne.s32.totalorder %s211, %s213
      %p220 = scmp.eq.s32.totalorder %s35, 1
      %p221 = por %p219, %p220
      %p222 = scmp.ne.s32.totalorder %s213, %s214
      %p223 = scmp.eq.s32.totalorder %s35, 0
      %p224 = por %p222, %p223
      %p225 = scmp.ne.s32.totalorder %s213, %s214
      %p226 = scmp.eq.s32.totalorder %s36, 1
      %p227 = por %p225, %p226
      %p229 = scmp.ne.s32.totalorder %s214, %s228
      %p230 = scmp.eq.s32.totalorder %s36, 0
      %p231 = por %p229, %p230
      %s233 = sadd.s32 %s232, 1
      %p236 = scmp.eq.s32.totalorder %s30, 1
      %p237 = scmp.ne.s32.totalorder %s232, %s234
      %p238 = scmp.eq.s32.totalorder %s30, 0
      %p239 = por %p237, %p238
      %p240 = scmp.ne.s32.totalorder %s232, %s234
      %p241 = scmp.eq.s32.totalorder %s35, 1
      %p242 = por %p240, %p241
      %p243 = scmp.ne.s32.totalorder %s234, %s235
      %p244 = scmp.eq.s32.totalorder %s35, 0
      %p245 = por %p243, %p244
      %p246 = scmp.ne.s32.totalorder %s234, %s235
      %p247 = scmp.eq.s32.totalorder %s36, 1
      %p248 = por %p246, %p247
      %p250 = scmp.ne.s32.totalorder %s235, %s249
      %p251 = scmp.eq.s32.totalorder %s36, 0
      %p252 = por %p250, %p251
      %s254 = sadd.s32 %s253, 1
      %p257 = scmp.eq.s32.totalorder %s30, 1
      %p258 = scmp.ne.s32.totalorder %s253, %s255
      %p259 = scmp.eq.s32.totalorder %s30, 0
      %p260 = por %p258, %p259
      %p261 = scmp.ne.s32.totalorder %s253, %s255
      %p262 = scmp.eq.s32.totalorder %s35, 1
      %p263 = por %p261, %p262
      %p264 = scmp.ne.s32.totalorder %s255, %s256
      %p265 = scmp.eq.s32.totalorder %s35, 0
      %p266 = por %p264, %p265
      %p267 = scmp.ne.s32.totalorder %s255, %s256
      %p268 = scmp.eq.s32.totalorder %s36, 1
      %p269 = por %p267, %p268
      %p271 = scmp.ne.s32.totalorder %s256, %s270
      %p272 = scmp.eq.s32.totalorder %s36, 0
      %p273 = por %p271, %p272
      %s275 = sadd.s32 %s274, 1
      %p278 = scmp.eq.s32.totalorder %s30, 1
      %p279 = scmp.ne.s32.totalorder %s274, %s276
      %p280 = scmp.eq.s32.totalorder %s30, 0
      %p281 = por %p279, %p280
      %p282 = scmp.ne.s32.totalorder %s274, %s276
      %p283 = scmp.eq.s32.totalorder %s35, 1
      %p284 = por %p282, %p283
      %p285 = scmp.ne.s32.totalorder %s276, %s277
      %p286 = scmp.eq.s32.totalorder %s35, 0
      %p287 = por %p285, %p286
      %p288 = scmp.ne.s32.totalorder %s276, %s277
      %p289 = scmp.eq.s32.totalorder %s36, 1
      %p290 = por %p288, %p289
      %p292 = scmp.ne.s32.totalorder %s277, %s291
      %p293 = scmp.eq.s32.totalorder %s36, 0
      %p294 = por %p292, %p293
      %s296 = sadd.s32 %s295, 1
      %p299 = scmp.eq.s32.totalorder %s30, 1
      %p300 = scmp.ne.s32.totalorder %s295, %s297
      %p301 = scmp.eq.s32.totalorder %s30, 0
      %p302 = por %p300, %p301
      %p303 = scmp.ne.s32.totalorder %s295, %s297
      %p304 = scmp.eq.s32.totalorder %s35, 1
      %p305 = por %p303, %p304
      %p306 = scmp.ne.s32.totalorder %s297, %s298
      %p307 = scmp.eq.s32.totalorder %s35, 0
      %p308 = por %p306, %p307
      %p309 = scmp.ne.s32.totalorder %s297, %s298
      %p310 = scmp.eq.s32.totalorder %s36, 1
      %p311 = por %p309, %p310
      %p313 = scmp.ne.s32.totalorder %s298, %s312
      %p314 = scmp.eq.s32.totalorder %s36, 0
      %p315 = por %p313, %p314
      %s317 = sadd.s32 %s316, 1
      %p320 = scmp.eq.s32.totalorder %s30, 1
      %p321 = scmp.ne.s32.totalorder %s316, %s318
      %p322 = scmp.eq.s32.totalorder %s30, 0
      %p323 = por %p321, %p322
      %p324 = scmp.ne.s32.totalorder %s316, %s318
      %p325 = scmp.eq.s32.totalorder %s35, 1
      %p326 = por %p324, %p325
      %p327 = scmp.ne.s32.totalorder %s318, %s319
      %p328 = scmp.eq.s32.totalorder %s35, 0
      %p329 = por %p327, %p328
      %p330 = scmp.ne.s32.totalorder %s318, %s319
      %p331 = scmp.eq.s32.totalorder %s36, 1
      %p332 = por %p330, %p331
      %p334 = scmp.ne.s32.totalorder %s319, %s333
      %p335 = scmp.eq.s32.totalorder %s36, 0
      %p336 = por %p334, %p335
      %s337 = ssub.s32 %s30, %s37
      %p338 = scmp.eq.s32.totalorder %s337, 0
      %s340 = sadd.s32 %s339, 1
      %s341 = scalar_select %p338, %s339, %s340
      %p344 = pneg %p338
      %p345 = scmp.eq.s32.totalorder %s30, 1
      %p346 = por %p344, %p345
      %p347 = scmp.ne.s32.totalorder %s339, %s342
      %p348 = scmp.eq.s32.totalorder %s30, 0
      %p349 = por %p347, %p348
      %p350 = scmp.ne.s32.totalorder %s339, %s342
      %p351 = scmp.eq.s32.totalorder %s35, 1
      %p352 = por %p350, %p351
      %p353 = scmp.ne.s32.totalorder %s342, %s343
      %p354 = scmp.eq.s32.totalorder %s35, 0
      %p355 = por %p353, %p354
      %p356 = scmp.ne.s32.totalorder %s342, %s343
      %p357 = scmp.eq.s32.totalorder %s36, 1
      %p358 = por %p356, %p357
      %p360 = scmp.ne.s32.totalorder %s343, %s359
      %p361 = scmp.eq.s32.totalorder %s36, 0
      %p362 = por %p360, %p361
      %s363 = ssub.s32 %s30, %s37
      %p364 = scmp.eq.s32.totalorder %s363, 0
      %s366 = sadd.s32 %s365, 1
      %s367 = scalar_select %p364, %s365, %s366
      %p370 = pneg %p364
      %p371 = scmp.eq.s32.totalorder %s30, 1
      %p372 = por %p370, %p371
      %p373 = scmp.ne.s32.totalorder %s365, %s368
      %p374 = scmp.eq.s32.totalorder %s30, 0
      %p375 = por %p373, %p374
      %p376 = scmp.ne.s32.totalorder %s365, %s368
      %p377 = scmp.eq.s32.totalorder %s35, 1
      %p378 = por %p376, %p377
      %p379 = scmp.ne.s32.totalorder %s368, %s369
      %p380 = scmp.eq.s32.totalorder %s35, 0
      %p381 = por %p379, %p380
      %p382 = scmp.ne.s32.totalorder %s368, %s369
      %p383 = scmp.eq.s32.totalorder %s36, 1
      %p384 = por %p382, %p383
      %p386 = scmp.ne.s32.totalorder %s369, %s385
      %p387 = scmp.eq.s32.totalorder %s36, 0
      %p388 = por %p386, %p387
      %p389 = scmp.le.s32.totalorder 1, %s30
      %p390 = scmp.lt.s32.totalorder %s30, 3
      %p391 = pnand %p389, %p390
      %p392 = pneg %p391
      // Predicated region
      $region9: #{tpu_custom_call.1} parent=5 // pred_check
        _
      $region10: #{tpu_custom_call.1} parent=5 // pred_check_branch
        %394 = sbr.rel (%p391) target = $region12
      $region11: #{tpu_custom_call.1} parent=5 // pred_region
        %s395 = ssub.s32 %s30, 1
        // Predicated region
        $region13: #{tpu_custom_call.1} parent=11 // pred_check
          %p396 = pneg %p77
        $region14: #{tpu_custom_call.1} parent=11 // pred_check_branch
          %398 = sbr.rel (%p396) target = $region16
        $region15: #{tpu_custom_call.1} parent=11 // pred_region
          _
        $region16: #{tpu_custom_call.1} parent=11 // pred_fallthru
          _
        // Predicated region
        $region17: #{tpu_custom_call.1} parent=11 // pred_check
          %p399 = pneg %p98
        $region18: #{tpu_custom_call.1} parent=11 // pred_check_branch
          %401 = sbr.rel (%p399) target = $region20
        $region19: #{tpu_custom_call.1} parent=11 // pred_region
          _
        $region20: #{tpu_custom_call.1} parent=11 // pred_fallthru
          _
        // Predicated region
        $region21: #{tpu_custom_call.1} parent=11 // pred_check
          %p402 = pneg %p119
        $region22: #{tpu_custom_call.1} parent=11 // pred_check_branch
          %404 = sbr.rel (%p402) target = $region24
        $region23: #{tpu_custom_call.1} parent=11 // pred_region
          _
        $region24: #{tpu_custom_call.1} parent=11 // pred_fallthru
          _
        // Predicated region
        $region25: #{tpu_custom_call.1} parent=11 // pred_check
          %p405 = pneg %p140
        $region26: #{tpu_custom_call.1} parent=11 // pred_check_branch
          %407 = sbr.rel (%p405) target = $region28
        $region27: #{tpu_custom_call.1} parent=11 // pred_region
          _
        $region28: #{tpu_custom_call.1} parent=11 // pred_fallthru
          _
        // Predicated region
        $region29: #{tpu_custom_call.1} parent=11 // pred_check
          %p408 = pneg %p161
        $region30: #{tpu_custom_call.1} parent=11 // pred_check_branch
          %410 = sbr.rel (%p408) target = $region32
        $region31: #{tpu_custom_call.1} parent=11 // pred_region
          _
        $region32: #{tpu_custom_call.1} parent=11 // pred_fallthru
          _
        // Predicated region
        $region33: #{tpu_custom_call.1} parent=11 // pred_check
          %p411 = pneg %p182
        $region34: #{tpu_custom_call.1} parent=11 // pred_check_branch
          %413 = sbr.rel (%p411) target = $region36
        $region35: #{tpu_custom_call.1} parent=11 // pred_region
          _
        $region36: #{tpu_custom_call.1} parent=11 // pred_fallthru
          _
        // Predicated region
        $region37: #{tpu_custom_call.1} parent=11 // pred_check
          %p414 = pneg %p203
        $region38: #{tpu_custom_call.1} parent=11 // pred_check_branch
          %416 = sbr.rel (%p414) target = $region40
        $region39: #{tpu_custom_call.1} parent=11 // pred_region
          _
        $region40: #{tpu_custom_call.1} parent=11 // pred_fallthru
          _
        // Predicated region
        $region41: #{tpu_custom_call.1} parent=11 // pred_check
          %p417 = pneg %p224
        $region42: #{tpu_custom_call.1} parent=11 // pred_check_branch
          %419 = sbr.rel (%p417) target = $region44
        $region43: #{tpu_custom_call.1} parent=11 // pred_region
          _
        $region44: #{tpu_custom_call.1} parent=11 // pred_fallthru
          _
        // Predicated region
        $region45: #{tpu_custom_call.1} parent=11 // pred_check
          %p420 = pneg %p245
        $region46: #{tpu_custom_call.1} parent=11 // pred_check_branch
          %422 = sbr.rel (%p420) target = $region48
        $region47: #{tpu_custom_call.1} parent=11 // pred_region
          _
        $region48: #{tpu_custom_call.1} parent=11 // pred_fallthru
          _
        // Predicated region
        $region49: #{tpu_custom_call.1} parent=11 // pred_check
          %p423 = pneg %p266
        $region50: #{tpu_custom_call.1} parent=11 // pred_check_branch
          %425 = sbr.rel (%p423) target = $region52
        $region51: #{tpu_custom_call.1} parent=11 // pred_region
          _
        $region52: #{tpu_custom_call.1} parent=11 // pred_fallthru
          _
        // Predicated region
        $region53: #{tpu_custom_call.1} parent=11 // pred_check
          %p426 = pneg %p287
        $region54: #{tpu_custom_call.1} parent=11 // pred_check_branch
          %428 = sbr.rel (%p426) target = $region56
        $region55: #{tpu_custom_call.1} parent=11 // pred_region
          _
        $region56: #{tpu_custom_call.1} parent=11 // pred_fallthru
          _
        // Predicated region
        $region57: #{tpu_custom_call.1} parent=11 // pred_check
          %p429 = pneg %p308
        $region58: #{tpu_custom_call.1} parent=11 // pred_check_branch
          %431 = sbr.rel (%p429) target = $region60
        $region59: #{tpu_custom_call.1} parent=11 // pred_region
          _
        $region60: #{tpu_custom_call.1} parent=11 // pred_fallthru
          _
        // Predicated region
        $region61: #{tpu_custom_call.1} parent=11 // pred_check
          %p432 = pneg %p329
        $region62: #{tpu_custom_call.1} parent=11 // pred_check_branch
          %434 = sbr.rel (%p432) target = $region64
        $region63: #{tpu_custom_call.1} parent=11 // pred_region
          _
        $region64: #{tpu_custom_call.1} parent=11 // pred_fallthru
          _
      $region12: #{tpu_custom_call.1} parent=5 // pred_fallthru
        _
      %p435 = scmp.lt.s32.totalorder %s30, 2
      // Predicated region
      $region65: #{tpu_custom_call.1} parent=5 // pred_check
        %p436 = pneg %p435
      $region66: #{tpu_custom_call.1} parent=5 // pred_check_branch
        %438 = sbr.rel (%p436) target = $region68
      $region67: #{tpu_custom_call.1} parent=5 // pred_region
        // Predicated region
        $region69: #{tpu_custom_call.1} parent=67 // pred_check
          %p439 = pneg %p50
        $region70: #{tpu_custom_call.1} parent=67 // pred_check_branch
          %441 = sbr.rel (%p439) target = $region72
        $region71: #{tpu_custom_call.1} parent=67 // pred_region
          %p442 = scmp.lt.s32.totalorder %s30, 1
          %s443 = scalar_select %p442, %s30, 1
          %s444 = smul.addr %s443, 2
          %s445 = scalar_lea.vmem %s0, %s444
        $region72: #{tpu_custom_call.1} parent=67 // pred_fallthru
          _
      $region68: #{tpu_custom_call.1} parent=5 // pred_fallthru
        _
      %p446 = scmp.le.s32.totalorder 1, %s30
      %p447 = scmp.lt.s32.totalorder %s30, 3
      %p448 = pnand %p446, %p447
      %p449 = pneg %p448
      // Predicated region
      $region73: #{tpu_custom_call.1} parent=5 // pred_check
        _
      $region74: #{tpu_custom_call.1} parent=5 // pred_check_branch
        %451 = sbr.rel (%p448) target = $region76
      $region75: #{tpu_custom_call.1} parent=5 // pred_region
        %s452 = ssub.s32 %s30, 1
        %p453 = scmp.lt.s32.totalorder %s35, 1
        %s454 = scalar_select %p453, %s35, 1
        %s455 = smul.addr %s454, 2
        %s456 = scalar_lea.vmem %s0, %s455
        %p457 = pneg %p56
        %p458 = pneg %p53
        %p459 = pneg %p77
        %p460 = pneg %p74
        %p461 = pneg %p98
        %p462 = pneg %p95
        %p463 = pneg %p119
        %p464 = pneg %p116
        %p465 = pneg %p140
        %p466 = pneg %p137
        %p467 = pneg %p161
        %p468 = pneg %p158
        %p469 = pneg %p182
        %p470 = pneg %p179
        %p471 = pneg %p203
        %p472 = pneg %p200
        %p473 = pneg %p224
        %p474 = pneg %p221
        %p475 = pneg %p245
        %p476 = pneg %p242
        %p477 = pneg %p266
        %p478 = pneg %p263
        %p479 = pneg %p287
        %p480 = pneg %p284
        %p481 = pneg %p308
        %p482 = pneg %p305
        %p483 = pneg %p329
        %p484 = pneg %p326
        %p485 = pneg %p355
        %p486 = pneg %p352
        %s487 = sand.u32 %s342, 1
        %s488 = scalar_lea.sflag [#allocation5], %s487
        %s489 = sand.u32 %s342, 1
        %s490 = smul.addr %s489, 4
        %s491 = scalar_lea.vmem [#allocation4], %s490
        %p492 = pneg %p381
        %p493 = pneg %p378
        %s494 = sand.u32 %s368, 1
        %s495 = scalar_lea.sflag [#allocation7], %s494
        %s496 = sand.u32 %s368, 1
        %s497 = smul.addr %s496, 4
        %s498 = scalar_lea.vmem [#allocation6], %s497
        %p499 = scmp.lt.s32.totalorder %s35, 1
        %s500 = scalar_select %p499, %s35, 1
        %s501 = smul.addr %s500, 2
        %s502 = scalar_lea.vmem %s0, %s501
        %v504 = vld [vmem:[%s502] sm:$0x3]
        %v505 = vlaneseq
        %v506 = vand.u32 %v505, 127
        %vm507 = vcmp.lt.s32.totalorder %v506, 16
        %v508 = vld [vmem:[%s3] sm:$0xf]
        %v509 = vld [vmem:[%s3 + $0x4] sm:$0xf]
        %v510 = vld [vmem:[%s3 + $0x8] sm:$0xf]
        %v511 = vld [vmem:[%s3 + $0xc] sm:$0xf]
        %v512 = vld [vmem:[%s4] sm:$0xff]
        %v513 = vld [vmem:[%s4 + $0x8] sm:$0xff]
        %v514 = vld [vmem:[%s4 + $0x10] sm:$0xff]
        %v515 = vld [vmem:[%s4 + $0x18] sm:$0xff]
        %517 = vset.pattern.permute.xlu0 0
        %518 = vperm.xlu0 %517, %v512
        %v519 = vpop.permute.xlu0 %518
        %522 = vset.pattern.permute.xlu0 0
        %523 = vperm.xlu0 %522, %v513
        %v524 = vpop.permute.xlu0 %523
        %527 = vset.pattern.permute.xlu0 0
        %528 = vperm.xlu0 %527, %v514
        %v529 = vpop.permute.xlu0 %528
        %532 = vset.pattern.permute.xlu0 0
        %533 = vperm.xlu0 %532, %v515
        %v534 = vpop.permute.xlu0 %533
        %v540 = vunpack.c.l.b16 %v508
        %v541 = vunpack.c.l.b16 %v509
        %v542 = vunpack.c.l.b16 %v510
        %v543 = vunpack.c.l.b16 %v511
        %v544 = vpack.c.b16 %v541, %v540
        %v545 = vpack.c.b16 %v543, %v542
        %vm546 = vcmask 31744
        %v548 = vsel %vm546, %v544, 0
        %v551 = vsel %vm546, %v545, 0
        %vm553 = vcmask 1041408
        %v555 = vsel %vm553, %v504, 0
        %557 = vmatpush.bf16.msra.mxu0 0
        %558 = vmatpush.bf16.msra.mxu0 0
        %559 = vmatpush.bf16.msra.mxu0 0
        %560 = vmatpush.bf16.msra.mxu0 0
        %561 = vmatpush.bf16.msra.mxu0 0
        %562 = vmatpush.bf16.msra.mxu0 0
        %563 = vmatpush.bf16.msra.mxu0 0
        %564 = vmatpush.bf16.msra.mxu0 %v555
        %565 = vmatmul.bf16.gmra.mxu0 %v548
        %v566 = vpop.f32.mrf.mxu0
        %v567 = vadd.f32 %v519, %v566
        %v568 = vpop.f32.mrf.mxu0
        %v569 = vadd.f32 %v524, %v568
        %570 = vmatmul.bf16.gmra.mxu0 %v551
        %v571 = vpop.f32.mrf.mxu0
        %v572 = vadd.f32 %v529, %v571
        %v573 = vpop.f32.mrf.mxu0
        %v574 = vadd.f32 %v534, %v573
        %575 = vdwg.mxu0
        %s576 = sld [smem:[#allocation2]]
        %vm577 = vcmp.ge.f32.partialorder %v567, 0.0
        %vm578 = vcmp.ge.f32.partialorder %v569, 0.0
        %vm579 = vcmp.ge.f32.partialorder %v572, 0.0
        %vm580 = vcmp.ge.f32.partialorder %v574, 0.0
        %v581 = vstv %s576
        %v582 = vmul.f32 %v581, %v567
        %v583 = vmul.f32 %v581, %v569
        %v584 = vmul.f32 %v581, %v572
        %v585 = vmul.f32 %v581, %v574
        %v586 = vsel %vm577, %v567, %v582
        %v587 = vsel %vm578, %v569, %v583
        %v588 = vsel %vm579, %v572, %v584
        %v589 = vsel %vm580, %v574, %v585
        %v590 = vld [vmem:[%s5] sm:$0xff]
        %v591 = vld [vmem:[%s5 + $0x8] sm:$0xff]
        %v592 = vld [vmem:[%s5 + $0x10] sm:$0xff]
        %v593 = vld [vmem:[%s5 + $0x18] sm:$0xff]
        %v594 = vld [vmem:[%s6] sm:$0xff]
        %v595 = vld [vmem:[%s6 + $0x8] sm:$0xff]
        %v596 = vld [vmem:[%s6 + $0x10] sm:$0xff]
        %v597 = vld [vmem:[%s6 + $0x18] sm:$0xff]
        %v598 = vsel %vm507, 1, 0
        %vm599 = vcmp.eq.s32.totalorder %v598, 1
        %v600 = vsel %vm599, %v586, 0.0
        %v601 = vsel %vm599, %v587, 0.0
        %v602 = vsel %vm599, %v588, 0.0
        %v603 = vsel %vm599, %v589, 0.0
        %v604 = vadd.f32 %v600, %v601
        %v605 = vadd.f32 %v604, %v602
        %v606 = vadd.f32 %v605, %v603
        %607 = vadd.xlane.f32.xlu0 %v606
        %v608 = vpop.xlane.xlu0 %607
        %v609 = vrot.slane %v608, 4
        %v610 = vadd.f32 %v608, %v609
        %v611 = vrot.slane %v610, 2
        %v612 = vadd.f32 %v610, %v611
        %v613 = vrot.slane %v612, 1
        %v614 = vadd.f32 %v612, %v613
        %s615 = vtos %v614
        %s616 = smul.f32 %s615, 0.001953125
        %v617 = vmul.f32 %v600, %v600
        %v618 = vmul.f32 %v601, %v601
        %v619 = vmul.f32 %v602, %v602
        %v620 = vmul.f32 %v603, %v603
        %v621 = vadd.f32 %v617, %v618
        %v622 = vadd.f32 %v621, %v619
        %v623 = vadd.f32 %v622, %v620
        %624 = vadd.xlane.f32.xlu0 %v623
        %v625 = vpop.xlane.xlu0 %624
        %v626 = vrot.slane %v625, 4
        %v627 = vadd.f32 %v625, %v626
        %v628 = vrot.slane %v627, 2
        %v629 = vadd.f32 %v627, %v628
        %v630 = vrot.slane %v629, 1
        %v631 = vadd.f32 %v629, %v630
        %s632 = vtos %v631
        %s633 = smul.f32 %s632, 0.001953125
        %s634 = smul.f32 %s616, %s616
        %s635 = ssub.f32 %s633, %s634
        %s636 = smax.f32 %s635, 0.0
        %s637 = sadd.f32 %s636, 1e-08
        %v638 = vstv %s637
        %v639 = vrsqrt.pop %v638
        %v640 = vmul.f32 %v639, %v638
        %v641 = vmul.f32 %v640, %v639
        %v642 = vmul.f32 0.5, %v641
        %v643 = vsub.f32 1.5, %v642
        %v644 = vmul.f32 %v639, %v643
        %vm645 = vweird.f32 %v638
        %vm646 = vweird.f32 %v639
        %vm647 = vmor %vm645, %vm646
        %v648 = vsel %vm647, %v639, %v644
        %s649 = vtos %v648
        %v650 = vstv %s649
        %v651 = vmul.f32 %v590, %v650
        %v652 = vmul.f32 %v591, %v650
        %v653 = vmul.f32 %v592, %v650
        %v654 = vmul.f32 %v593, %v650
        %v655 = vstv %s616
        %v656 = vmul.f32 %v655, %v651
        %v657 = vmul.f32 %v655, %v652
        %v658 = vmul.f32 %v655, %v653
        %v659 = vmul.f32 %v655, %v654
        %v660 = vsub.f32 %v594, %v656
        %v661 = vsub.f32 %v595, %v657
        %v662 = vsub.f32 %v596, %v658
        %v663 = vsub.f32 %v597, %v659
        %665 = vset.pattern.permute.xlu0 0
        %666 = vperm.xlu0 %665, %v651
        %v667 = vpop.permute.xlu0 %666
        %670 = vset.pattern.permute.xlu0 0
        %671 = vperm.xlu0 %670, %v652
        %v672 = vpop.permute.xlu0 %671
        %675 = vset.pattern.permute.xlu0 0
        %676 = vperm.xlu0 %675, %v653
        %v677 = vpop.permute.xlu0 %676
        %680 = vset.pattern.permute.xlu0 0
        %681 = vperm.xlu0 %680, %v654
        %v682 = vpop.permute.xlu0 %681
        %v684 = vmul.f32 %v600, %v667
        %v685 = vmul.f32 %v601, %v672
        %v686 = vmul.f32 %v602, %v677
        %v687 = vmul.f32 %v603, %v682
        %689 = vset.pattern.permute.xlu0 0
        %690 = vperm.xlu0 %689, %v660
        %v691 = vpop.permute.xlu0 %690
        %694 = vset.pattern.permute.xlu0 0
        %695 = vperm.xlu0 %694, %v661
        %v696 = vpop.permute.xlu0 %695
        %699 = vset.pattern.permute.xlu0 0
        %700 = vperm.xlu0 %699, %v662
        %v701 = vpop.permute.xlu0 %700
        %704 = vset.pattern.permute.xlu0 0
        %705 = vperm.xlu0 %704, %v663
        %v706 = vpop.permute.xlu0 %705
        %v708 = vadd.f32 %v684, %v691
        %v709 = vadd.f32 %v685, %v696
        %v710 = vadd.f32 %v686, %v701
        %v711 = vadd.f32 %v687, %v706
        %v712 = vsel %vm599, %v708, 0.0
        %v713 = vsel %vm599, %v709, 0.0
        %v714 = vsel %vm599, %v710, 0.0
        %v715 = vsel %vm599, %v711, 0.0
        %716 = vrot.lane.b32.xlu0 %v712, 2
        %v717 = vpop.permute.xlu0 %716
        %718 = vrot.lane.b32.xlu0 %v713, 2
        %v719 = vpop.permute.xlu0 %718
        %720 = vrot.lane.b32.xlu0 %v714, 2
        %v721 = vpop.permute.xlu0 %720
        %722 = vrot.lane.b32.xlu0 %v715, 2
        %v723 = vpop.permute.xlu0 %722
        %v724 = vld [vmem:[%s7] sm:$0xff]
        %v725 = vld [vmem:[%s7 + $0x8] sm:$0xff]
        %v726 = vld [vmem:[%s7 + $0x10] sm:$0xff]
        %v727 = vld [vmem:[%s7 + $0x18] sm:$0xff]
        %729 = vset.pattern.permute.xlu0 0
        %730 = vperm.xlu0 %729, %v724
        %v731 = vpop.permute.xlu0 %730
        %734 = vset.pattern.permute.xlu0 0
        %735 = vperm.xlu0 %734, %v725
        %v736 = vpop.permute.xlu0 %735
        %739 = vset.pattern.permute.xlu0 0
        %740 = vperm.xlu0 %739, %v726
        %v741 = vpop.permute.xlu0 %740
        %744 = vset.pattern.permute.xlu0 0
        %745 = vperm.xlu0 %744, %v727
        %v746 = vpop.permute.xlu0 %745
        %v748 = vmul.f32 %v731, %v717
        %v749 = vmul.f32 %v736, %v719
        %v750 = vmul.f32 %v741, %v721
        %v751 = vmul.f32 %v746, %v723
        %s752 = scalar_lea.vmem %s7, 32
        %v753 = vld [vmem:[%s752] sm:$0xff]
        %v754 = vld [vmem:[%s752 + $0x8] sm:$0xff]
        %v755 = vld [vmem:[%s752 + $0x10] sm:$0xff]
        %v756 = vld [vmem:[%s752 + $0x18] sm:$0xff]
        %758 = vset.pattern.permute.xlu0 0
        %759 = vperm.xlu0 %758, %v753
        %v760 = vpop.permute.xlu0 %759
        %763 = vset.pattern.permute.xlu0 0
        %764 = vperm.xlu0 %763, %v754
        %v765 = vpop.permute.xlu0 %764
        %768 = vset.pattern.permute.xlu0 0
        %769 = vperm.xlu0 %768, %v755
        %v770 = vpop.permute.xlu0 %769
        %773 = vset.pattern.permute.xlu0 0
        %774 = vperm.xlu0 %773, %v756
        %v775 = vpop.permute.xlu0 %774
        %v777 = vmul.f32 %v760, %v712
        %v778 = vmul.f32 %v765, %v713
        %v779 = vmul.f32 %v770, %v714
        %v780 = vmul.f32 %v775, %v715
        %v781 = vadd.f32 %v748, %v777
        %v782 = vadd.f32 %v749, %v778
        %v783 = vadd.f32 %v750, %v779
        %v784 = vadd.f32 %v751, %v780
        %785 = vrot.lane.b32.xlu0 %v712, 126
        %v786 = vpop.permute.xlu0 %785
        %787 = vrot.lane.b32.xlu0 %v713, 126
        %v788 = vpop.permute.xlu0 %787
        %789 = vrot.lane.b32.xlu0 %v714, 126
        %v790 = vpop.permute.xlu0 %789
        %791 = vrot.lane.b32.xlu0 %v715, 126
        %v792 = vpop.permute.xlu0 %791
        %s793 = scalar_lea.vmem %s7, 64
        %v794 = vld [vmem:[%s793] sm:$0xff]
        %v795 = vld [vmem:[%s793 + $0x8] sm:$0xff]
        %v796 = vld [vmem:[%s793 + $0x10] sm:$0xff]
        %v797 = vld [vmem:[%s793 + $0x18] sm:$0xff]
        %799 = vset.pattern.permute.xlu0 0
        %800 = vperm.xlu0 %799, %v794
        %v801 = vpop.permute.xlu0 %800
        %804 = vset.pattern.permute.xlu0 0
        %805 = vperm.xlu0 %804, %v795
        %v806 = vpop.permute.xlu0 %805
        %809 = vset.pattern.permute.xlu0 0
        %810 = vperm.xlu0 %809, %v796
        %v811 = vpop.permute.xlu0 %810
        %814 = vset.pattern.permute.xlu0 0
        %815 = vperm.xlu0 %814, %v797
        %v816 = vpop.permute.xlu0 %815
        %v818 = vmul.f32 %v801, %v786
        %v819 = vmul.f32 %v806, %v788
        %v820 = vmul.f32 %v811, %v790
        %v821 = vmul.f32 %v816, %v792
        %v822 = vadd.f32 %v781, %v818
        %v823 = vadd.f32 %v782, %v819
        %v824 = vadd.f32 %v783, %v820
        %v825 = vadd.f32 %v784, %v821
        %v826 = vld [vmem:[%s8] sm:$0xff]
        %v827 = vld [vmem:[%s8 + $0x8] sm:$0xff]
        %v828 = vld [vmem:[%s8 + $0x10] sm:$0xff]
        %v829 = vld [vmem:[%s8 + $0x18] sm:$0xff]
        %831 = vset.pattern.permute.xlu0 0
        %832 = vperm.xlu0 %831, %v826
        %v833 = vpop.permute.xlu0 %832
        %836 = vset.pattern.permute.xlu0 0
        %837 = vperm.xlu0 %836, %v827
        %v838 = vpop.permute.xlu0 %837
        %841 = vset.pattern.permute.xlu0 0
        %842 = vperm.xlu0 %841, %v828
        %v843 = vpop.permute.xlu0 %842
        %846 = vset.pattern.permute.xlu0 0
        %847 = vperm.xlu0 %846, %v829
        %v848 = vpop.permute.xlu0 %847
        %v850 = vadd.f32 %v822, %v833
        %v851 = vadd.f32 %v823, %v838
        %v852 = vadd.f32 %v824, %v843
        %v853 = vadd.f32 %v825, %v848
        %s854 = sld [smem:[#allocation3]]
        %vm855 = vcmp.ge.f32.partialorder %v850, 0.0
        %vm856 = vcmp.ge.f32.partialorder %v851, 0.0
        %vm857 = vcmp.ge.f32.partialorder %v852, 0.0
        %vm858 = vcmp.ge.f32.partialorder %v853, 0.0
        %v859 = vstv %s854
        %v860 = vmul.f32 %v859, %v850
        %v861 = vmul.f32 %v859, %v851
        %v862 = vmul.f32 %v859, %v852
        %v863 = vmul.f32 %v859, %v853
        %v864 = vsel %vm855, %v850, %v860
        %v865 = vsel %vm856, %v851, %v861
        %v866 = vsel %vm857, %v852, %v862
        %v867 = vsel %vm858, %v853, %v863
        %v868 = vld [vmem:[%s9] sm:$0xff]
        %v869 = vld [vmem:[%s9 + $0x8] sm:$0xff]
        %v870 = vld [vmem:[%s9 + $0x10] sm:$0xff]
        %v871 = vld [vmem:[%s9 + $0x18] sm:$0xff]
        %v872 = vld [vmem:[%s10] sm:$0xff]
        %v873 = vld [vmem:[%s10 + $0x8] sm:$0xff]
        %v874 = vld [vmem:[%s10 + $0x10] sm:$0xff]
        %v875 = vld [vmem:[%s10 + $0x18] sm:$0xff]
        %v876 = vsel %vm599, %v864, 0.0
        %v877 = vsel %vm599, %v865, 0.0
        %v878 = vsel %vm599, %v866, 0.0
        %v879 = vsel %vm599, %v867, 0.0
        %v880 = vadd.f32 %v876, %v877
        %v881 = vadd.f32 %v880, %v878
        %v882 = vadd.f32 %v881, %v879
        %883 = vadd.xlane.f32.xlu0 %v882
        %v884 = vpop.xlane.xlu0 %883
        %v885 = vrot.slane %v884, 4
        %v886 = vadd.f32 %v884, %v885
        %v887 = vrot.slane %v886, 2
        %v888 = vadd.f32 %v886, %v887
        %v889 = vrot.slane %v888, 1
        %v890 = vadd.f32 %v888, %v889
        %s891 = vtos %v890
        %s892 = smul.f32 %s891, 0.001953125
        %v893 = vmul.f32 %v876, %v876
        %v894 = vmul.f32 %v877, %v877
        %v895 = vmul.f32 %v878, %v878
        %v896 = vmul.f32 %v879, %v879
        %v897 = vadd.f32 %v893, %v894
        %v898 = vadd.f32 %v897, %v895
        %v899 = vadd.f32 %v898, %v896
        %900 = vadd.xlane.f32.xlu0 %v899
        %v901 = vpop.xlane.xlu0 %900
        %v902 = vrot.slane %v901, 4
        %v903 = vadd.f32 %v901, %v902
        %v904 = vrot.slane %v903, 2
        %v905 = vadd.f32 %v903, %v904
        %v906 = vrot.slane %v905, 1
        %v907 = vadd.f32 %v905, %v906
        %s908 = vtos %v907
        %s909 = smul.f32 %s908, 0.001953125
        %s910 = smul.f32 %s892, %s892
        %s911 = ssub.f32 %s909, %s910
        %s912 = smax.f32 %s911, 0.0
        %s913 = sadd.f32 %s912, 1e-08
        %v914 = vstv %s913
        %v915 = vrsqrt.pop %v914
        %v916 = vmul.f32 %v915, %v914
        %v917 = vmul.f32 %v916, %v915
        %v918 = vmul.f32 0.5, %v917
        %v919 = vsub.f32 1.5, %v918
        %v920 = vmul.f32 %v915, %v919
        %vm921 = vweird.f32 %v914
        %vm922 = vweird.f32 %v915
        %vm923 = vmor %vm921, %vm922
        %v924 = vsel %vm923, %v915, %v920
        %s925 = vtos %v924
        %v926 = vstv %s925
        %v927 = vmul.f32 %v868, %v926
        %v928 = vmul.f32 %v869, %v926
        %v929 = vmul.f32 %v870, %v926
        %v930 = vmul.f32 %v871, %v926
        %v931 = vstv %s892
        %v932 = vmul.f32 %v931, %v927
        %v933 = vmul.f32 %v931, %v928
        %v934 = vmul.f32 %v931, %v929
        %v935 = vmul.f32 %v931, %v930
        %v936 = vsub.f32 %v872, %v932
        %v937 = vsub.f32 %v873, %v933
        %v938 = vsub.f32 %v874, %v934
        %v939 = vsub.f32 %v875, %v935
        %941 = vset.pattern.permute.xlu0 0
        %942 = vperm.xlu0 %941, %v927
        %v943 = vpop.permute.xlu0 %942
        %946 = vset.pattern.permute.xlu0 0
        %947 = vperm.xlu0 %946, %v928
        %v948 = vpop.permute.xlu0 %947
        %951 = vset.pattern.permute.xlu0 0
        %952 = vperm.xlu0 %951, %v929
        %v953 = vpop.permute.xlu0 %952
        %956 = vset.pattern.permute.xlu0 0
        %957 = vperm.xlu0 %956, %v930
        %v958 = vpop.permute.xlu0 %957
        %v960 = vmul.f32 %v876, %v943
        %v961 = vmul.f32 %v877, %v948
        %v962 = vmul.f32 %v878, %v953
        %v963 = vmul.f32 %v879, %v958
        %965 = vset.pattern.permute.xlu0 0
        %966 = vperm.xlu0 %965, %v936
        %v967 = vpop.permute.xlu0 %966
        %970 = vset.pattern.permute.xlu0 0
        %971 = vperm.xlu0 %970, %v937
        %v972 = vpop.permute.xlu0 %971
        %975 = vset.pattern.permute.xlu0 0
        %976 = vperm.xlu0 %975, %v938
        %v977 = vpop.permute.xlu0 %976
        %980 = vset.pattern.permute.xlu0 0
        %981 = vperm.xlu0 %980, %v939
        %v982 = vpop.permute.xlu0 %981
        %v984 = vadd.f32 %v960, %v967
        %v985 = vadd.f32 %v961, %v972
        %v986 = vadd.f32 %v962, %v977
        %v987 = vadd.f32 %v963, %v982
        %v988 = vld [vmem:[%s11] sm:$0xf]
        %v989 = vpack.c.bf16 %v985, %v984
        %v990 = vpack.c.bf16 %v987, %v986
        %vm991 = vcmask 261120
        %v993 = vsel %vm991, %v988, 0
        %995 = vmatpush.bf16.msra.mxu0 0
        %996 = vmatpush.bf16.msra.mxu0 0
        %997 = vmatpush.bf16.msra.mxu0 0
        %998 = vmatpush.bf16.msra.mxu0 0
        %999 = vmatpush.bf16.msra.mxu0 0
        %1000 = vmatpush.bf16.msra.mxu0 0
        %1001 = vmatpush.bf16.msra.mxu0 %v990
        %1002 = vmatpush.bf16.msra.mxu0 %v989
        %1003 = vmatmul.bf16.gmra.mxu0 %v993
        %v1004 = vpop.f32.mrf.mxu0
        %v1005 = vadd.f32 0.0, %v1004
        %v1006 = vpop.f32.mrf.mxu0
        %1007 = vdwg.mxu0
        %v1008 = vld [vmem:[%s12] sm:$0xf]
        %1010 = vset.pattern.permute.xlu0 0
        %1011 = vperm.xlu0 %1010, %v1008
        %v1012 = vpop.permute.xlu0 %1011
        %v1014 = vadd.f32 %v1005, %v1012
        %1015 = vst [vmem:[%s491] sm:$0xf] %v1014
        %v1016 = vld [vmem:[%s13] sm:$0xf]
        %1018 = vset.pattern.permute.xlu0 0
        %1019 = vperm.xlu0 %1018, %v1016
        %v1020 = vpop.permute.xlu0 %1019
        %v1021 = vrot.slane %v1020, 4
        %v1023 = vadd.f32 %v1005, %v1021
        %1024 = vst [vmem:[%s498 - $0x4] sm:$0xf0] %v1023
        %s1025 = sand.u32 %s342, 1
        %s1026 = scalar_lea.sflag [#allocation5], %s1025
        %s1027 = sand.u32 %s342, 1
        %s1028 = smul.addr %s1027, 4
        %s1029 = scalar_lea.vmem [#allocation4], %s1028
        %s1030 = sand.u32 %s368, 1
        %s1031 = scalar_lea.sflag [#allocation7], %s1030
        %s1032 = sand.u32 %s368, 1
        %s1033 = smul.addr %s1032, 4
        %s1034 = scalar_lea.vmem [#allocation6], %s1033
        // Predicated region
        $region77: #{tpu_custom_call.1} parent=75 // pred_check
          %p1035 = pneg %p352
        $region78: #{tpu_custom_call.1} parent=75 // pred_check_branch
          %1037 = sbr.rel (%p1035) target = $region80
        $region79: #{tpu_custom_call.1} parent=75 // pred_region
          %1039 = vsyncadd %s1026, 0
          %s1040 = smul.addr %s35, 4
          %s1041 = scalar_lea.hbm %s14, %s1040
          %s1043 = sshll.u32 %s1029, 4
          %s1044 = int_to_ptr.vmem [resolvable:$true] %s1043
          %s1045 = sshll.u32 %s1041, 4
          %s1046 = int_to_ptr.hbm [resolvable:$true] %s1045
          %1048 = dma.vmem_to_hbm [thread:$0]  %s1044, 64, %s1046, %s1026
        $region80: #{tpu_custom_call.1} parent=75 // pred_fallthru
          _
        // Predicated region
        $region81: #{tpu_custom_call.1} parent=75 // pred_check
          %p1049 = pneg %p378
        $region82: #{tpu_custom_call.1} parent=75 // pred_check_branch
          %1051 = sbr.rel (%p1049) target = $region84
        $region83: #{tpu_custom_call.1} parent=75 // pred_region
          %1053 = vsyncadd %s1031, 0
          %s1054 = smul.addr %s35, 4
          %s1055 = scalar_lea.hbm %s15, %s1054
          %s1057 = sshll.u32 %s1034, 4
          %s1058 = int_to_ptr.vmem [resolvable:$true] %s1057
          %s1059 = sshll.u32 %s1055, 4
          %s1060 = int_to_ptr.hbm [resolvable:$true] %s1059
          %1062 = dma.vmem_to_hbm [thread:$0]  %s1058, 64, %s1060, %s1031
        $region84: #{tpu_custom_call.1} parent=75 // pred_fallthru
          _
      $region76: #{tpu_custom_call.1} parent=5 // pred_fallthru
        _
      %p1063 = scmp.le.s32.totalorder 2, %s30
      // Predicated region
      $region85: #{tpu_custom_call.1} parent=5 // pred_check
        %p1064 = pneg %p1063
      $region86: #{tpu_custom_call.1} parent=5 // pred_check_branch
        %1066 = sbr.rel (%p1064) target = $region88
      $region87: #{tpu_custom_call.1} parent=5 // pred_region
        %s1067 = ssub.s32 %s30, 2
        // Predicated region
        $region89: #{tpu_custom_call.1} parent=87 // pred_check
          %p1068 = pneg %p358
        $region90: #{tpu_custom_call.1} parent=87 // pred_check_branch
          %1070 = sbr.rel (%p1068) target = $region92
        $region91: #{tpu_custom_call.1} parent=87 // pred_region
          %s1071 = sand.u32 %s343, 1
          %s1072 = scalar_lea.sflag [#allocation5], %s1071
          %s1073 = sand.u32 %s343, 1
          %s1074 = smul.addr %s1073, 4
          %s1075 = scalar_lea.vmem [#allocation4], %s1074
          %1077 = dma.done %s1072, 64
        $region92: #{tpu_custom_call.1} parent=87 // pred_fallthru
          _
        // Predicated region
        $region93: #{tpu_custom_call.1} parent=87 // pred_check
          %p1078 = pneg %p384
        $region94: #{tpu_custom_call.1} parent=87 // pred_check_branch
          %1080 = sbr.rel (%p1078) target = $region96
        $region95: #{tpu_custom_call.1} parent=87 // pred_region
          %s1081 = sand.u32 %s369, 1
          %s1082 = scalar_lea.sflag [#allocation7], %s1081
          %s1083 = sand.u32 %s369, 1
          %s1084 = smul.addr %s1083, 4
          %s1085 = scalar_lea.vmem [#allocation6], %s1084
          %1087 = dma.done %s1082, 64
        $region96: #{tpu_custom_call.1} parent=87 // pred_fallthru
          _
      $region88: #{tpu_custom_call.1} parent=5 // pred_fallthru
        _
    $region6: #{tpu_custom_call.1} parent=1 // loop_footer
      %s34 = sadd.s32 1, %s30
    $region7: #{tpu_custom_call.1} parent=1 // loop_footer_branch
      %29 = sbr.rel target = $region3
    $region8: #{tpu_custom_call.1} parent=1 // loop_exit
      _
    %1088 = vsyncpa [#allocation5], 1
    %s1089 = scalar_lea.sflag [#allocation5], 1
    %1090 = vsyncpa %s1089, 1
    %1091 = vsyncpa [#allocation7], 1
    %s1092 = scalar_lea.sflag [#allocation7], 1
    %1093 = vsyncpa %s1092, 1

</llo_original>
